<compile_context>
chip_gen: v7x
topology: tpu7x:2x2x1
jax: 0.10.0
libtpu: 0.0.40
codegen_flags: <defaults>
</compile_context>

<pallas_src>
import math
import functools

import jax
import jax.numpy as jnp
from jax import lax
from jax.experimental import pallas as pl
from jax.experimental.pallas import tpu as pltpu


def _flash_attention_kernel(xq_ref, xkv_ref, wqT_ref, bq_ref, wvT_ref, bv_ref,
                            o_ref,
                            q_sc, m_sc, l_sc, acc_sc,
                            *, num_heads, d_head):
    # xq_ref:  (1, TQ, D)   x rows for this query tile
    # xkv_ref: (1, TKV, D)  x rows for this key/value tile
    # wqT_ref: (D, D) bf16  fused, head-contiguous, scale-folded query weight (transposed)
    # bq_ref:  (1, D) f32   scale-folded query bias
    # wvT_ref: (D, D) bf16  fused, head-contiguous value weight (used for both K and V)
    # bv_ref:  (1, D) f32
    # o_ref:   (1, TQ, D)
    # q_sc:    (TQ, D) bf16          projected + scaled Q tile (computed at ki == 0)
    # m_sc/l_sc: (num_heads, TQ, 1) f32   online-softmax running max / sum
    # acc_sc:  (TQ, D) f32           per-head accumulators at static column slices
    ki = pl.program_id(2)
    n_kv = pl.num_programs(2)

    @pl.when(ki == 0)
    def _init():
        xq = xq_ref[0].astype(jnp.bfloat16)                                   # (TQ, D)
        q = jnp.dot(xq, wqT_ref[...], preferred_element_type=jnp.float32)
        q = q + bq_ref[...]                                                   # scale already folded in
        q_sc[...] = q.astype(jnp.bfloat16)
        m_sc[...] = jnp.full_like(m_sc, -jnp.inf)
        l_sc[...] = jnp.zeros_like(l_sc)
        acc_sc[...] = jnp.zeros_like(acc_sc)

    # Project this KV tile (module quirk: value() provides both K and V).
    xkv = xkv_ref[0].astype(jnp.bfloat16)                                     # (TKV, D)
    kv = jnp.dot(xkv, wvT_ref[...], preferred_element_type=jnp.float32) + bv_ref[...]
    kv_bf = kv.astype(jnp.bfloat16)

    for h in range(num_heads):                       # small static head count
        sl = slice(h * d_head, (h + 1) * d_head)     # static lane slice (head-contiguous)
        qh = q_sc[:, sl]                             # (TQ, d) bf16
        kh = kv_bf[:, sl]                            # (TKV, d) bf16 == V_h (K == V quirk)

        # scores = Q_h @ K_h^T (contract on d), f32 accumulation on the MXU.
        s = lax.dot_general(qh, kh, (((1,), (1,)), ((), ())),
                            preferred_element_type=jnp.float32)               # (TQ, TKV)

        m_prev = m_sc[h]                                                       # (TQ, 1)
        m_new = jnp.maximum(m_prev, jnp.max(s, axis=-1, keepdims=True))
        alpha = jnp.exp(m_prev - m_new)
        p = jnp.exp(s - m_new)                                                 # f32

        l_sc[h] = alpha * l_sc[h] + jnp.sum(p, axis=-1, keepdims=True)
        acc_sc[:, sl] = alpha * acc_sc[:, sl] + jnp.dot(
            p.astype(jnp.bfloat16), kh, preferred_element_type=jnp.float32)   # (TQ, d)
        m_sc[h] = m_new

    @pl.when(ki == n_kv - 1)
    def _finalize():
        # Normalise per head in the scratch (EUP reciprocal), then one lane-dense store.
        for h in range(num_heads):
            sl = slice(h * d_head, (h + 1) * d_head)
            inv = pl.reciprocal(l_sc[h], approx=True)                          # (TQ, 1)
            acc_sc[:, sl] = acc_sc[:, sl] * inv
        o_ref[0] = acc_sc[...].astype(o_ref.dtype)


def _choose_tile(s, preferred):
    """Largest multiple-of-8 divisor of s that is <= preferred (or s itself)."""
    if s <= preferred:
        return s
    t = (min(preferred, s) // 8) * 8
    while t >= 8 and s % t != 0:
        t -= 8
    return t if t >= 8 else s


def _vmem_limit_bytes():
    """Scoped-VMEM budget derived from the chip (≈54 MiB v7x, ≈108 MiB v5e/v6e)."""
    try:
        info = pltpu.get_tpu_info()
        cap = getattr(info, "vmem_capacity_bytes", None)
        if cap:
            return min(int(cap * 0.85), 112 * 1024 * 1024)
    except Exception:
        pass
    return 48 * 1024 * 1024


def attention_pallas(x, Wq, bq, Wv, bv, num_heads, *, out_dtype=None,
                     q_tile=256, kv_tile=512):
    B, S, D = x.shape
    d_head = D // num_heads
    out_dtype = x.dtype if out_dtype is None else out_dtype   # pass bf16 if consumer tolerates it

    TQ = _choose_tile(S, q_tile)
    TKV = _choose_tile(S, kv_tile)
    grid = (B, S // TQ, S // TKV)

    # Head-column permutation: the module splits heads as '(d n)' (head = inner factor of
    # the Linear output), i.e. head h owns output features {h, h+n, h+2n, ...}. Permute the
    # Linear weight rows so head h's outputs become the contiguous columns
    # [h*d_head, (h+1)*d_head) of one fused (D,D) projection: perm[h*d_head + di] = di*n + h.
    perm = jnp.arange(D).reshape(d_head, num_heads).T.reshape(-1)

    # Fold the 1/sqrt(d_head) softmax scale into the Q projection (host-side, O(D^2), once).
    scale = 1.0 / math.sqrt(d_head)
    wqT = (Wq[perm, :] * scale).T.astype(jnp.bfloat16)        # (D, D)
    bq_p = (bq[perm] * scale).reshape(1, D).astype(jnp.float32)
    wvT = Wv[perm, :].T.astype(jnp.bfloat16)                  # (D, D); value() used for K and V
    bv_p = bv[perm].reshape(1, D).astype(jnp.float32)

    kernel = functools.partial(_flash_attention_kernel,
                               num_heads=num_heads, d_head=d_head)

    return pl.pallas_call(
        kernel,
        out_shape=jax.ShapeDtypeStruct((B, S, D), out_dtype),
        grid_spec=pltpu.PrefetchScalarGridSpec(
            num_scalar_prefetch=0,
            grid=grid,
            in_specs=[
                # x for the query tile (constant over the kv axis -> fetched once per (b, qi)).
                pl.BlockSpec((1, TQ, D), lambda b, qi, ki: (b, qi, 0)),
                # x for the kv tile.
                pl.BlockSpec((1, TKV, D), lambda b, qi, ki: (b, ki, 0)),
                # Weights/biases: constant index_maps -> Pallas skips re-fetching across the grid.
                pl.BlockSpec((D, D), lambda b, qi, ki: (0, 0)),
                pl.BlockSpec((1, D), lambda b, qi, ki: (0, 0)),
                pl.BlockSpec((D, D), lambda b, qi, ki: (0, 0)),
                pl.BlockSpec((1, D), lambda b, qi, ki: (0, 0)),
            ],
            out_specs=pl.BlockSpec((1, TQ, D), lambda b, qi, ki: (b, qi, 0)),
            scratch_shapes=[
                pltpu.VMEM((TQ, D), jnp.bfloat16),            # projected Q tile
                pltpu.VMEM((num_heads, TQ, 1), jnp.float32),  # running max m
                pltpu.VMEM((num_heads, TQ, 1), jnp.float32),  # running sum l
                pltpu.VMEM((TQ, D), jnp.float32),             # output accumulator
            ],
        ),
        compiler_params=pltpu.CompilerParams(
            dimension_semantics=("parallel", "parallel", "arbitrary"),
            vmem_limit_bytes=_vmem_limit_bytes()),
    )(x, x, wqT, bq_p, wvT, bv_p)


def attention_reference(x, Wq, bq, Wv, bv, num_heads):
    """Pure-JAX (f32) transcription of the PyTorch forward (for verification)."""
    B, S, D = x.shape
    d = D // num_heads
    Q = x @ Wq.T + bq
    Q = Q.reshape(B, S, d, num_heads).transpose(0, 3, 1, 2)      # B n S d
    K = x @ Wv.T + bv                                            # module uses value() for K
    KT = K.reshape(B, S, d, num_heads).transpose(0, 3, 2, 1)     # B n d S
    V = K.reshape(B, S, d, num_heads).transpose(0, 3, 1, 2)      # B n S d
    proj = jnp.matmul(Q, KT) / math.sqrt(d)
    attn = jnp.matmul(jax.nn.softmax(proj, axis=-1), V)          # B n S d
    return attn.transpose(0, 2, 1, 3).reshape(B, S, D)           # B S (n d)


if __name__ == "__main__":
    B, S, d_model, num_heads = 2, 8, 32, 4

    key = jax.random.PRNGKey(0)
    kx, kq, kbq, kk, kbk, kv, kbv = jax.random.split(key, 7)
    bound = 1.0 / math.sqrt(d_model)

    x = jax.random.normal(kx, (B, S, d_model), dtype=jnp.float32)
    Wq = jax.random.uniform(kq, (d_model, d_model), jnp.float32, -bound, bound)
    bq = jax.random.uniform(kbq, (d_model,), jnp.float32, -bound, bound)
    Wk = jax.random.uniform(kk, (d_model, d_model), jnp.float32, -bound, bound)  # unused in forward (module quirk)
    bk = jax.random.uniform(kbk, (d_model,), jnp.float32, -bound, bound)         # unused in forward (module quirk)
    Wv = jax.random.uniform(kv, (d_model, d_model), jnp.float32, -bound, bound)
    bv = jax.random.uniform(kbv, (d_model,), jnp.float32, -bound, bound)

    out = attention_pallas(x, Wq, bq, Wv, bv, num_heads)
    out = jax.block_until_ready(out)

    ref = attention_reference(x, Wq, bq, Wv, bv, num_heads)
    assert out.shape == (B, S, d_model)
    # Tolerance accounts for bf16 MXU inputs + approx reciprocal (f32 reference).
    assert jnp.allclose(out, ref, atol=2e-2, rtol=2e-2), "mismatch vs reference"

    print("KERNEL_OK")
</pallas_src>

<mosaic_0001>
module attributes {stable_mosaic.version = 11 : i64} {
  func.func @_flash_attention_kernel(%arg0: i32, %arg1: i32, %arg2: i32, %arg3: memref<1x8x32xf32, #tpu.memory_space<vmem>>, %arg4: memref<1x8x32xf32, #tpu.memory_space<vmem>>, %arg5: memref<32x32xbf16, #tpu.memory_space<vmem>>, %arg6: memref<1x32xf32, #tpu.memory_space<vmem>>, %arg7: memref<32x32xbf16, #tpu.memory_space<vmem>>, %arg8: memref<1x32xf32, #tpu.memory_space<vmem>>, %arg9: memref<1x8x32xf32, #tpu.memory_space<vmem>>, %arg10: memref<8x32xbf16, #tpu.memory_space<vmem>>, %arg11: memref<4x8x1xf32, #tpu.memory_space<vmem>>, %arg12: memref<4x8x1xf32, #tpu.memory_space<vmem>>, %arg13: memref<8x32xf32, #tpu.memory_space<vmem>>) attributes {dimension_semantics = [#tpu.dimension_semantics<parallel>, #tpu.dimension_semantics<parallel>, #tpu.dimension_semantics<arbitrary>], iteration_bounds = array<i64: 2, 1, 1>, scalar_prefetch = 0 : i64, scratch_operands = 4 : i64, tpu.core_type = #tpu.core_type<tc>, window_params = [{transform_indices = @transform_0, window_bounds = array<i64: 1, 8, 32>}, {transform_indices = @transform_1, window_bounds = array<i64: 1, 8, 32>}, {pipeline_mode = #tpu.pipeline_mode<synchronous>, transform_indices = @transform_2, window_bounds = array<i64: 32, 32>}, {pipeline_mode = #tpu.pipeline_mode<synchronous>, transform_indices = @transform_3, window_bounds = array<i64: 1, 32>}, {pipeline_mode = #tpu.pipeline_mode<synchronous>, transform_indices = @transform_4, window_bounds = array<i64: 32, 32>}, {pipeline_mode = #tpu.pipeline_mode<synchronous>, transform_indices = @transform_5, window_bounds = array<i64: 1, 32>}, {transform_indices = @transform_6, window_bounds = array<i64: 1, 8, 32>}]} {
    %c0_i32 = arith.constant 0 : i32
    %0 = arith.cmpi eq, %arg2, %c0_i32 : i32
    %1 = arith.extui %0 : i1 to i32
    %c0_i32_0 = arith.constant 0 : i32
    %2 = arith.cmpi ne, %1, %c0_i32_0 : i32
    scf.if %2 {
      %c0_91 = arith.constant 0 : index
      %c0_92 = arith.constant 0 : index
      %c0_93 = arith.constant 0 : index
      %143 = vector.load %arg3[%c0_91, %c0_92, %c0_93] : memref<1x8x32xf32, #tpu.memory_space<vmem>>, vector<1x8x32xf32>
      %144 = vector.shape_cast %143 : vector<1x8x32xf32> to vector<8x32xf32>
      %145 = arith.truncf %144 : vector<8x32xf32> to vector<8x32xbf16>
      %c0_94 = arith.constant 0 : index
      %c0_95 = arith.constant 0 : index
      %146 = vector.load %arg5[%c0_94, %c0_95] : memref<32x32xbf16, #tpu.memory_space<vmem>>, vector<32x32xbf16>
      %cst_96 = arith.constant dense<0.000000e+00> : vector<8x32xf32>
      %147 = tpu.matmul %145, %146, %cst_96 {dimension_numbers = #tpu.dot_dimension_numbers<[1], [0], [0], [1], [0, 0, 1, 1], [], []>} : vector<8x32xbf16>, vector<32x32xbf16>, vector<8x32xf32> -> vector<8x32xf32>
      %c0_97 = arith.constant 0 : index
      %c0_98 = arith.constant 0 : index
      %148 = vector.load %arg6[%c0_97, %c0_98] : memref<1x32xf32, #tpu.memory_space<vmem>>, vector<1x32xf32>
      %149 = vector.broadcast %148 : vector<1x32xf32> to vector<8x32xf32>
      %150 = arith.addf %147, %149 : vector<8x32xf32>
      %151 = arith.truncf %150 : vector<8x32xf32> to vector<8x32xbf16>
      %c0_99 = arith.constant 0 : index
      %c0_100 = arith.constant 0 : index
      %152 = vector.load %arg10[%c0_99, %c0_100] : memref<8x32xbf16, #tpu.memory_space<vmem>>, vector<8x32xbf16>
      tpu.vector_store %arg10[%c0_99, %c0_100], %151 {strides = array<i32>} : memref<8x32xbf16, #tpu.memory_space<vmem>>, vector<8x32xbf16>,
      %cst_101 = arith.constant 0xFF800000 : f32
      %153 = vector.broadcast %cst_101 : f32 to vector<4x8x1xf32>
      %c0_102 = arith.constant 0 : index
      %c0_103 = arith.constant 0 : index
      %c0_104 = arith.constant 0 : index
      %154 = vector.load %arg11[%c0_102, %c0_103, %c0_104] : memref<4x8x1xf32, #tpu.memory_space<vmem>>, vector<4x8x1xf32>
      tpu.vector_store %arg11[%c0_102, %c0_103, %c0_104], %153 {strides = array<i32>} : memref<4x8x1xf32, #tpu.memory_space<vmem>>, vector<4x8x1xf32>,
      %cst_105 = arith.constant 0.000000e+00 : f32
      %155 = vector.broadcast %cst_105 : f32 to vector<4x8x1xf32>
      %c0_106 = arith.constant 0 : index
      %c0_107 = arith.constant 0 : index
      %c0_108 = arith.constant 0 : index
      %156 = vector.load %arg12[%c0_106, %c0_107, %c0_108] : memref<4x8x1xf32, #tpu.memory_space<vmem>>, vector<4x8x1xf32>
      tpu.vector_store %arg12[%c0_106, %c0_107, %c0_108], %155 {strides = array<i32>} : memref<4x8x1xf32, #tpu.memory_space<vmem>>, vector<4x8x1xf32>,
      %cst_109 = arith.constant 0.000000e+00 : f32
      %157 = vector.broadcast %cst_109 : f32 to vector<8x32xf32>
      %c0_110 = arith.constant 0 : index
      %c0_111 = arith.constant 0 : index
      %158 = vector.load %arg13[%c0_110, %c0_111] : memref<8x32xf32, #tpu.memory_space<vmem>>, vector<8x32xf32>
      tpu.vector_store %arg13[%c0_110, %c0_111], %157 {strides = array<i32>} : memref<8x32xf32, #tpu.memory_space<vmem>>, vector<8x32xf32>,
    } else {
    }
    %c0 = arith.constant 0 : index
    %c0_1 = arith.constant 0 : index
    %c0_2 = arith.constant 0 : index
    %3 = vector.load %arg4[%c0, %c0_1, %c0_2] : memref<1x8x32xf32, #tpu.memory_space<vmem>>, vector<1x8x32xf32>
    %4 = vector.shape_cast %3 : vector<1x8x32xf32> to vector<8x32xf32>
    %5 = arith.truncf %4 : vector<8x32xf32> to vector<8x32xbf16>
    %c0_3 = arith.constant 0 : index
    %c0_4 = arith.constant 0 : index
    %6 = vector.load %arg7[%c0_3, %c0_4] : memref<32x32xbf16, #tpu.memory_space<vmem>>, vector<32x32xbf16>
    %cst = arith.constant dense<0.000000e+00> : vector<8x32xf32>
    %7 = tpu.matmul %5, %6, %cst {dimension_numbers = #tpu.dot_dimension_numbers<[1], [0], [0], [1], [0, 0, 1, 1], [], []>} : vector<8x32xbf16>, vector<32x32xbf16>, vector<8x32xf32> -> vector<8x32xf32>
    %c0_5 = arith.constant 0 : index
    %c0_6 = arith.constant 0 : index
    %8 = vector.load %arg8[%c0_5, %c0_6] : memref<1x32xf32, #tpu.memory_space<vmem>>, vector<1x32xf32>
    %9 = vector.broadcast %8 : vector<1x32xf32> to vector<8x32xf32>
    %10 = arith.addf %7, %9 : vector<8x32xf32>
    %11 = arith.truncf %10 : vector<8x32xf32> to vector<8x32xbf16>
    %c0_7 = arith.constant 0 : index
    %c0_8 = arith.constant 0 : index
    %12 = vector.load %arg10[%c0_7, %c0_8] : memref<8x32xbf16, #tpu.memory_space<vmem>>, vector<8x8xbf16>
    %13 = vector.extract_strided_slice %11 {offsets = [0, 0], sizes = [8, 8], strides = [1, 1]} : vector<8x32xbf16> to vector<8x8xbf16>
    %cst_9 = arith.constant dense<0.000000e+00> : vector<8x8xf32>
    %14 = tpu.matmul %12, %13, %cst_9 {dimension_numbers = #tpu.dot_dimension_numbers<[1], [1], [0], [0], [0, 0, 1, 0], [], []>} : vector<8x8xbf16>, vector<8x8xbf16>, vector<8x8xf32> -> vector<8x8xf32>
    %c0_10 = arith.constant 0 : index
    %c0_11 = arith.constant 0 : index
    %c0_12 = arith.constant 0 : index
    %15 = vector.load %arg11[%c0_10, %c0_11, %c0_12] : memref<4x8x1xf32, #tpu.memory_space<vmem>>, vector<1x8x1xf32>
    %16 = vector.shape_cast %15 : vector<1x8x1xf32> to vector<8x1xf32>
    %cst_13 = arith.constant dense<0xFF800000> : vector<8xf32>
    %17 = vector.multi_reduction <maximumf>, %14, %cst_13 [1] : vector<8x8xf32> to vector<8xf32>
    %18 = vector.shape_cast %17 : vector<8xf32> to vector<8x1xf32>
    %19 = arith.maximumf %16, %18 : vector<8x1xf32>
    %20 = arith.subf %16, %19 : vector<8x1xf32>
    %21 = math.exp %20 : vector<8x1xf32>
    %22 = vector.broadcast %19 : vector<8x1xf32> to vector<8x8xf32>
    %23 = arith.subf %14, %22 : vector<8x8xf32>
    %24 = math.exp %23 : vector<8x8xf32>
    %c0_14 = arith.constant 0 : index
    %c0_15 = arith.constant 0 : index
    %c0_16 = arith.constant 0 : index
    %25 = vector.load %arg12[%c0_14, %c0_15, %c0_16] : memref<4x8x1xf32, #tpu.memory_space<vmem>>, vector<1x8x1xf32>
    %26 = vector.shape_cast %25 : vector<1x8x1xf32> to vector<8x1xf32>
    %27 = arith.mulf %21, %26 : vector<8x1xf32>
    %cst_17 = arith.constant dense<0.000000e+00> : vector<8xf32>
    %28 = vector.multi_reduction <add>, %24, %cst_17 [1] : vector<8x8xf32> to vector<8xf32>
    %29 = vector.shape_cast %28 : vector<8xf32> to vector<8x1xf32>
    %30 = arith.addf %27, %29 : vector<8x1xf32>
    %c0_18 = arith.constant 0 : index
    %c0_19 = arith.constant 0 : index
    %c0_20 = arith.constant 0 : index
    %31 = vector.load %arg12[%c0_18, %c0_19, %c0_20] : memref<4x8x1xf32, #tpu.memory_space<vmem>>, vector<1x8x1xf32>
    %32 = vector.shape_cast %31 : vector<1x8x1xf32> to vector<8x1xf32>
    %33 = vector.shape_cast %30 : vector<8x1xf32> to vector<1x8x1xf32>
    tpu.vector_store %arg12[%c0_18, %c0_19, %c0_20], %33 {strides = array<i32>} : memref<4x8x1xf32, #tpu.memory_space<vmem>>, vector<1x8x1xf32>,
    %c0_21 = arith.constant 0 : index
    %c0_22 = arith.constant 0 : index
    %34 = vector.load %arg13[%c0_21, %c0_22] : memref<8x32xf32, #tpu.memory_space<vmem>>, vector<8x8xf32>
    %35 = vector.broadcast %21 : vector<8x1xf32> to vector<8x8xf32>
    %36 = arith.mulf %35, %34 : vector<8x8xf32>
    %37 = arith.truncf %24 : vector<8x8xf32> to vector<8x8xbf16>
    %cst_23 = arith.constant dense<0.000000e+00> : vector<8x8xf32>
    %38 = tpu.matmul %37, %13, %cst_23 {dimension_numbers = #tpu.dot_dimension_numbers<[1], [0], [0], [1], [0, 0, 1, 1], [], []>} : vector<8x8xbf16>, vector<8x8xbf16>, vector<8x8xf32> -> vector<8x8xf32>
    %39 = arith.addf %36, %38 : vector<8x8xf32>
    %c0_24 = arith.constant 0 : index
    %c0_25 = arith.constant 0 : index
    %40 = vector.load %arg13[%c0_24, %c0_25] : memref<8x32xf32, #tpu.memory_space<vmem>>, vector<8x8xf32>
    tpu.vector_store %arg13[%c0_24, %c0_25], %39 {strides = array<i32>} : memref<8x32xf32, #tpu.memory_space<vmem>>, vector<8x8xf32>,
    %c0_26 = arith.constant 0 : index
    %c0_27 = arith.constant 0 : index
    %c0_28 = arith.constant 0 : index
    %41 = vector.load %arg11[%c0_26, %c0_27, %c0_28] : memref<4x8x1xf32, #tpu.memory_space<vmem>>, vector<1x8x1xf32>
    %42 = vector.shape_cast %41 : vector<1x8x1xf32> to vector<8x1xf32>
    %43 = vector.shape_cast %19 : vector<8x1xf32> to vector<1x8x1xf32>
    tpu.vector_store %arg11[%c0_26, %c0_27, %c0_28], %43 {strides = array<i32>} : memref<4x8x1xf32, #tpu.memory_space<vmem>>, vector<1x8x1xf32>,
    %c0_29 = arith.constant 0 : index
    %c8 = arith.constant 8 : index
    %44 = vector.load %arg10[%c0_29, %c8] : memref<8x32xbf16, #tpu.memory_space<vmem>>, vector<8x8xbf16>
    %45 = vector.extract_strided_slice %11 {offsets = [0, 8], sizes = [8, 8], strides = [1, 1]} : vector<8x32xbf16> to vector<8x8xbf16>
    %cst_30 = arith.constant dense<0.000000e+00> : vector<8x8xf32>
    %46 = tpu.matmul %44, %45, %cst_30 {dimension_numbers = #tpu.dot_dimension_numbers<[1], [1], [0], [0], [0, 0, 1, 0], [], []>} : vector<8x8xbf16>, vector<8x8xbf16>, vector<8x8xf32> -> vector<8x8xf32>
    %c1 = arith.constant 1 : index
    %c0_31 = arith.constant 0 : index
    %c0_32 = arith.constant 0 : index
    %47 = vector.load %arg11[%c1, %c0_31, %c0_32] : memref<4x8x1xf32, #tpu.memory_space<vmem>>, vector<1x8x1xf32>
    %48 = vector.shape_cast %47 : vector<1x8x1xf32> to vector<8x1xf32>
    %cst_33 = arith.constant dense<0xFF800000> : vector<8xf32>
    %49 = vector.multi_reduction <maximumf>, %46, %cst_33 [1] : vector<8x8xf32> to vector<8xf32>
    %50 = vector.shape_cast %49 : vector<8xf32> to vector<8x1xf32>
    %51 = arith.maximumf %48, %50 : vector<8x1xf32>
    %52 = arith.subf %48, %51 : vector<8x1xf32>
    %53 = math.exp %52 : vector<8x1xf32>
    %54 = vector.broadcast %51 : vector<8x1xf32> to vector<8x8xf32>
    %55 = arith.subf %46, %54 : vector<8x8xf32>
    %56 = math.exp %55 : vector<8x8xf32>
    %c1_34 = arith.constant 1 : index
    %c0_35 = arith.constant 0 : index
    %c0_36 = arith.constant 0 : index
    %57 = vector.load %arg12[%c1_34, %c0_35, %c0_36] : memref<4x8x1xf32, #tpu.memory_space<vmem>>, vector<1x8x1xf32>
    %58 = vector.shape_cast %57 : vector<1x8x1xf32> to vector<8x1xf32>
    %59 = arith.mulf %53, %58 : vector<8x1xf32>
    %cst_37 = arith.constant dense<0.000000e+00> : vector<8xf32>
    %60 = vector.multi_reduction <add>, %56, %cst_37 [1] : vector<8x8xf32> to vector<8xf32>
    %61 = vector.shape_cast %60 : vector<8xf32> to vector<8x1xf32>
    %62 = arith.addf %59, %61 : vector<8x1xf32>
    %c1_38 = arith.constant 1 : index
    %c0_39 = arith.constant 0 : index
    %c0_40 = arith.constant 0 : index
    %63 = vector.load %arg12[%c1_38, %c0_39, %c0_40] : memref<4x8x1xf32, #tpu.memory_space<vmem>>, vector<1x8x1xf32>
    %64 = vector.shape_cast %63 : vector<1x8x1xf32> to vector<8x1xf32>
    %65 = vector.shape_cast %62 : vector<8x1xf32> to vector<1x8x1xf32>
    tpu.vector_store %arg12[%c1_38, %c0_39, %c0_40], %65 {strides = array<i32>} : memref<4x8x1xf32, #tpu.memory_space<vmem>>, vector<1x8x1xf32>,
    %c0_41 = arith.constant 0 : index
    %c8_42 = arith.constant 8 : index
    %66 = vector.load %arg13[%c0_41, %c8_42] : memref<8x32xf32, #tpu.memory_space<vmem>>, vector<8x8xf32>
    %67 = vector.broadcast %53 : vector<8x1xf32> to vector<8x8xf32>
    %68 = arith.mulf %67, %66 : vector<8x8xf32>
    %69 = arith.truncf %56 : vector<8x8xf32> to vector<8x8xbf16>
    %cst_43 = arith.constant dense<0.000000e+00> : vector<8x8xf32>
    %70 = tpu.matmul %69, %45, %cst_43 {dimension_numbers = #tpu.dot_dimension_numbers<[1], [0], [0], [1], [0, 0, 1, 1], [], []>} : vector<8x8xbf16>, vector<8x8xbf16>, vector<8x8xf32> -> vector<8x8xf32>
    %71 = arith.addf %68, %70 : vector<8x8xf32>
    %c0_44 = arith.constant 0 : index
    %c8_45 = arith.constant 8 : index
    %72 = vector.load %arg13[%c0_44, %c8_45] : memref<8x32xf32, #tpu.memory_space<vmem>>, vector<8x8xf32>
    tpu.vector_store %arg13[%c0_44, %c8_45], %71 {strides = array<i32>} : memref<8x32xf32, #tpu.memory_space<vmem>>, vector<8x8xf32>,
    %c1_46 = arith.constant 1 : index
    %c0_47 = arith.constant 0 : index
    %c0_48 = arith.constant 0 : index
    %73 = vector.load %arg11[%c1_46, %c0_47, %c0_48] : memref<4x8x1xf32, #tpu.memory_space<vmem>>, vector<1x8x1xf32>
    %74 = vector.shape_cast %73 : vector<1x8x1xf32> to vector<8x1xf32>
    %75 = vector.shape_cast %51 : vector<8x1xf32> to vector<1x8x1xf32>
    tpu.vector_store %arg11[%c1_46, %c0_47, %c0_48], %75 {strides = array<i32>} : memref<4x8x1xf32, #tpu.memory_space<vmem>>, vector<1x8x1xf32>,
    %c0_49 = arith.constant 0 : index
    %c16 = arith.constant 16 : index
    %76 = vector.load %arg10[%c0_49, %c16] : memref<8x32xbf16, #tpu.memory_space<vmem>>, vector<8x8xbf16>
    %77 = vector.extract_strided_slice %11 {offsets = [0, 16], sizes = [8, 8], strides = [1, 1]} : vector<8x32xbf16> to vector<8x8xbf16>
    %cst_50 = arith.constant dense<0.000000e+00> : vector<8x8xf32>
    %78 = tpu.matmul %76, %77, %cst_50 {dimension_numbers = #tpu.dot_dimension_numbers<[1], [1], [0], [0], [0, 0, 1, 0], [], []>} : vector<8x8xbf16>, vector<8x8xbf16>, vector<8x8xf32> -> vector<8x8xf32>
    %c2 = arith.constant 2 : index
    %c0_51 = arith.constant 0 : index
    %c0_52 = arith.constant 0 : index
    %79 = vector.load %arg11[%c2, %c0_51, %c0_52] : memref<4x8x1xf32, #tpu.memory_space<vmem>>, vector<1x8x1xf32>
    %80 = vector.shape_cast %79 : vector<1x8x1xf32> to vector<8x1xf32>
    %cst_53 = arith.constant dense<0xFF800000> : vector<8xf32>
    %81 = vector.multi_reduction <maximumf>, %78, %cst_53 [1] : vector<8x8xf32> to vector<8xf32>
    %82 = vector.shape_cast %81 : vector<8xf32> to vector<8x1xf32>
    %83 = arith.maximumf %80, %82 : vector<8x1xf32>
    %84 = arith.subf %80, %83 : vector<8x1xf32>
    %85 = math.exp %84 : vector<8x1xf32>
    %86 = vector.broadcast %83 : vector<8x1xf32> to vector<8x8xf32>
    %87 = arith.subf %78, %86 : vector<8x8xf32>
    %88 = math.exp %87 : vector<8x8xf32>
    %c2_54 = arith.constant 2 : index
    %c0_55 = arith.constant 0 : index
    %c0_56 = arith.constant 0 : index
    %89 = vector.load %arg12[%c2_54, %c0_55, %c0_56] : memref<4x8x1xf32, #tpu.memory_space<vmem>>, vector<1x8x1xf32>
    %90 = vector.shape_cast %89 : vector<1x8x1xf32> to vector<8x1xf32>
    %91 = arith.mulf %85, %90 : vector<8x1xf32>
    %cst_57 = arith.constant dense<0.000000e+00> : vector<8xf32>
    %92 = vector.multi_reduction <add>, %88, %cst_57 [1] : vector<8x8xf32> to vector<8xf32>
    %93 = vector.shape_cast %92 : vector<8xf32> to vector<8x1xf32>
    %94 = arith.addf %91, %93 : vector<8x1xf32>
    %c2_58 = arith.constant 2 : index
    %c0_59 = arith.constant 0 : index
    %c0_60 = arith.constant 0 : index
    %95 = vector.load %arg12[%c2_58, %c0_59, %c0_60] : memref<4x8x1xf32, #tpu.memory_space<vmem>>, vector<1x8x1xf32>
    %96 = vector.shape_cast %95 : vector<1x8x1xf32> to vector<8x1xf32>
    %97 = vector.shape_cast %94 : vector<8x1xf32> to vector<1x8x1xf32>
    tpu.vector_store %arg12[%c2_58, %c0_59, %c0_60], %97 {strides = array<i32>} : memref<4x8x1xf32, #tpu.memory_space<vmem>>, vector<1x8x1xf32>,
    %c0_61 = arith.constant 0 : index
    %c16_62 = arith.constant 16 : index
    %98 = vector.load %arg13[%c0_61, %c16_62] : memref<8x32xf32, #tpu.memory_space<vmem>>, vector<8x8xf32>
    %99 = vector.broadcast %85 : vector<8x1xf32> to vector<8x8xf32>
    %100 = arith.mulf %99, %98 : vector<8x8xf32>
    %101 = arith.truncf %88 : vector<8x8xf32> to vector<8x8xbf16>
    %cst_63 = arith.constant dense<0.000000e+00> : vector<8x8xf32>
    %102 = tpu.matmul %101, %77, %cst_63 {dimension_numbers = #tpu.dot_dimension_numbers<[1], [0], [0], [1], [0, 0, 1, 1], [], []>} : vector<8x8xbf16>, vector<8x8xbf16>, vector<8x8xf32> -> vector<8x8xf32>
    %103 = arith.addf %100, %102 : vector<8x8xf32>
    %c0_64 = arith.constant 0 : index
    %c16_65 = arith.constant 16 : index
    %104 = vector.load %arg13[%c0_64, %c16_65] : memref<8x32xf32, #tpu.memory_space<vmem>>, vector<8x8xf32>
    tpu.vector_store %arg13[%c0_64, %c16_65], %103 {strides = array<i32>} : memref<8x32xf32, #tpu.memory_space<vmem>>, vector<8x8xf32>,
    %c2_66 = arith.constant 2 : index
    %c0_67 = arith.constant 0 : index
    %c0_68 = arith.constant 0 : index
    %105 = vector.load %arg11[%c2_66, %c0_67, %c0_68] : memref<4x8x1xf32, #tpu.memory_space<vmem>>, vector<1x8x1xf32>
    %106 = vector.shape_cast %105 : vector<1x8x1xf32> to vector<8x1xf32>
    %107 = vector.shape_cast %83 : vector<8x1xf32> to vector<1x8x1xf32>
    tpu.vector_store %arg11[%c2_66, %c0_67, %c0_68], %107 {strides = array<i32>} : memref<4x8x1xf32, #tpu.memory_space<vmem>>, vector<1x8x1xf32>,
    %c0_69 = arith.constant 0 : index
    %c24 = arith.constant 24 : index
    %108 = vector.load %arg10[%c0_69, %c24] : memref<8x32xbf16, #tpu.memory_space<vmem>>, vector<8x8xbf16>
    %109 = vector.extract_strided_slice %11 {offsets = [0, 24], sizes = [8, 8], strides = [1, 1]} : vector<8x32xbf16> to vector<8x8xbf16>
    %cst_70 = arith.constant dense<0.000000e+00> : vector<8x8xf32>
    %110 = tpu.matmul %108, %109, %cst_70 {dimension_numbers = #tpu.dot_dimension_numbers<[1], [1], [0], [0], [0, 0, 1, 0], [], []>} : vector<8x8xbf16>, vector<8x8xbf16>, vector<8x8xf32> -> vector<8x8xf32>
    %c3 = arith.constant 3 : index
    %c0_71 = arith.constant 0 : index
    %c0_72 = arith.constant 0 : index
    %111 = vector.load %arg11[%c3, %c0_71, %c0_72] : memref<4x8x1xf32, #tpu.memory_space<vmem>>, vector<1x8x1xf32>
    %112 = vector.shape_cast %111 : vector<1x8x1xf32> to vector<8x1xf32>
    %cst_73 = arith.constant dense<0xFF800000> : vector<8xf32>
    %113 = vector.multi_reduction <maximumf>, %110, %cst_73 [1] : vector<8x8xf32> to vector<8xf32>
    %114 = vector.shape_cast %113 : vector<8xf32> to vector<8x1xf32>
    %115 = arith.maximumf %112, %114 : vector<8x1xf32>
    %116 = arith.subf %112, %115 : vector<8x1xf32>
    %117 = math.exp %116 : vector<8x1xf32>
    %118 = vector.broadcast %115 : vector<8x1xf32> to vector<8x8xf32>
    %119 = arith.subf %110, %118 : vector<8x8xf32>
    %120 = math.exp %119 : vector<8x8xf32>
    %c3_74 = arith.constant 3 : index
    %c0_75 = arith.constant 0 : index
    %c0_76 = arith.constant 0 : index
    %121 = vector.load %arg12[%c3_74, %c0_75, %c0_76] : memref<4x8x1xf32, #tpu.memory_space<vmem>>, vector<1x8x1xf32>
    %122 = vector.shape_cast %121 : vector<1x8x1xf32> to vector<8x1xf32>
    %123 = arith.mulf %117, %122 : vector<8x1xf32>
    %cst_77 = arith.constant dense<0.000000e+00> : vector<8xf32>
    %124 = vector.multi_reduction <add>, %120, %cst_77 [1] : vector<8x8xf32> to vector<8xf32>
    %125 = vector.shape_cast %124 : vector<8xf32> to vector<8x1xf32>
    %126 = arith.addf %123, %125 : vector<8x1xf32>
    %c3_78 = arith.constant 3 : index
    %c0_79 = arith.constant 0 : index
    %c0_80 = arith.constant 0 : index
    %127 = vector.load %arg12[%c3_78, %c0_79, %c0_80] : memref<4x8x1xf32, #tpu.memory_space<vmem>>, vector<1x8x1xf32>
    %128 = vector.shape_cast %127 : vector<1x8x1xf32> to vector<8x1xf32>
    %129 = vector.shape_cast %126 : vector<8x1xf32> to vector<1x8x1xf32>
    tpu.vector_store %arg12[%c3_78, %c0_79, %c0_80], %129 {strides = array<i32>} : memref<4x8x1xf32, #tpu.memory_space<vmem>>, vector<1x8x1xf32>,
    %c0_81 = arith.constant 0 : index
    %c24_82 = arith.constant 24 : index
    %130 = vector.load %arg13[%c0_81, %c24_82] : memref<8x32xf32, #tpu.memory_space<vmem>>, vector<8x8xf32>
    %131 = vector.broadcast %117 : vector<8x1xf32> to vector<8x8xf32>
    %132 = arith.mulf %131, %130 : vector<8x8xf32>
    %133 = arith.truncf %120 : vector<8x8xf32> to vector<8x8xbf16>
    %cst_83 = arith.constant dense<0.000000e+00> : vector<8x8xf32>
    %134 = tpu.matmul %133, %109, %cst_83 {dimension_numbers = #tpu.dot_dimension_numbers<[1], [0], [0], [1], [0, 0, 1, 1], [], []>} : vector<8x8xbf16>, vector<8x8xbf16>, vector<8x8xf32> -> vector<8x8xf32>
    %135 = arith.addf %132, %134 : vector<8x8xf32>
    %c0_84 = arith.constant 0 : index
    %c24_85 = arith.constant 24 : index
    %136 = vector.load %arg13[%c0_84, %c24_85] : memref<8x32xf32, #tpu.memory_space<vmem>>, vector<8x8xf32>
    tpu.vector_store %arg13[%c0_84, %c24_85], %135 {strides = array<i32>} : memref<8x32xf32, #tpu.memory_space<vmem>>, vector<8x8xf32>,
    %c3_86 = arith.constant 3 : index
    %c0_87 = arith.constant 0 : index
    %c0_88 = arith.constant 0 : index
    %137 = vector.load %arg11[%c3_86, %c0_87, %c0_88] : memref<4x8x1xf32, #tpu.memory_space<vmem>>, vector<1x8x1xf32>
    %138 = vector.shape_cast %137 : vector<1x8x1xf32> to vector<8x1xf32>
    %139 = vector.shape_cast %115 : vector<8x1xf32> to vector<1x8x1xf32>
    tpu.vector_store %arg11[%c3_86, %c0_87, %c0_88], %139 {strides = array<i32>} : memref<4x8x1xf32, #tpu.memory_space<vmem>>, vector<1x8x1xf32>,
    %c0_i32_89 = arith.constant 0 : i32
    %140 = arith.cmpi eq, %arg2, %c0_i32_89 : i32
    %141 = arith.extui %140 : i1 to i32
    %c0_i32_90 = arith.constant 0 : i32
    %142 = arith.cmpi ne, %141, %c0_i32_90 : i32
    scf.if %142 {
      %c0_91 = arith.constant 0 : index
      %c0_92 = arith.constant 0 : index
      %c0_93 = arith.constant 0 : index
      %143 = vector.load %arg12[%c0_91, %c0_92, %c0_93] : memref<4x8x1xf32, #tpu.memory_space<vmem>>, vector<1x8x1xf32>
      %144 = vector.shape_cast %143 : vector<1x8x1xf32> to vector<8x1xf32>
      %145 = tpu.reciprocal %144 {approx = true} : vector<8x1xf32> -> vector<8x1xf32>
      %c0_94 = arith.constant 0 : index
      %c0_95 = arith.constant 0 : index
      %146 = vector.load %arg13[%c0_94, %c0_95] : memref<8x32xf32, #tpu.memory_space<vmem>>, vector<8x8xf32>
      %147 = vector.broadcast %145 : vector<8x1xf32> to vector<8x8xf32>
      %148 = arith.mulf %146, %147 : vector<8x8xf32>
      %c0_96 = arith.constant 0 : index
      %c0_97 = arith.constant 0 : index
      %149 = vector.load %arg13[%c0_96, %c0_97] : memref<8x32xf32, #tpu.memory_space<vmem>>, vector<8x8xf32>
      tpu.vector_store %arg13[%c0_96, %c0_97], %148 {strides = array<i32>} : memref<8x32xf32, #tpu.memory_space<vmem>>, vector<8x8xf32>,
      %c1_98 = arith.constant 1 : index
      %c0_99 = arith.constant 0 : index
      %c0_100 = arith.constant 0 : index
      %150 = vector.load %arg12[%c1_98, %c0_99, %c0_100] : memref<4x8x1xf32, #tpu.memory_space<vmem>>, vector<1x8x1xf32>
      %151 = vector.shape_cast %150 : vector<1x8x1xf32> to vector<8x1xf32>
      %152 = tpu.reciprocal %151 {approx = true} : vector<8x1xf32> -> vector<8x1xf32>
      %c0_101 = arith.constant 0 : index
      %c8_102 = arith.constant 8 : index
      %153 = vector.load %arg13[%c0_101, %c8_102] : memref<8x32xf32, #tpu.memory_space<vmem>>, vector<8x8xf32>
      %154 = vector.broadcast %152 : vector<8x1xf32> to vector<8x8xf32>
      %155 = arith.mulf %153, %154 : vector<8x8xf32>
      %c0_103 = arith.constant 0 : index
      %c8_104 = arith.constant 8 : index
      %156 = vector.load %arg13[%c0_103, %c8_104] : memref<8x32xf32, #tpu.memory_space<vmem>>, vector<8x8xf32>
      tpu.vector_store %arg13[%c0_103, %c8_104], %155 {strides = array<i32>} : memref<8x32xf32, #tpu.memory_space<vmem>>, vector<8x8xf32>,
      %c2_105 = arith.constant 2 : index
      %c0_106 = arith.constant 0 : index
      %c0_107 = arith.constant 0 : index
      %157 = vector.load %arg12[%c2_105, %c0_106, %c0_107] : memref<4x8x1xf32, #tpu.memory_space<vmem>>, vector<1x8x1xf32>
      %158 = vector.shape_cast %157 : vector<1x8x1xf32> to vector<8x1xf32>
      %159 = tpu.reciprocal %158 {approx = true} : vector<8x1xf32> -> vector<8x1xf32>
      %c0_108 = arith.constant 0 : index
      %c16_109 = arith.constant 16 : index
      %160 = vector.load %arg13[%c0_108, %c16_109] : memref<8x32xf32, #tpu.memory_space<vmem>>, vector<8x8xf32>
      %161 = vector.broadcast %159 : vector<8x1xf32> to vector<8x8xf32>
      %162 = arith.mulf %160, %161 : vector<8x8xf32>
      %c0_110 = arith.constant 0 : index
      %c16_111 = arith.constant 16 : index
      %163 = vector.load %arg13[%c0_110, %c16_111] : memref<8x32xf32, #tpu.memory_space<vmem>>, vector<8x8xf32>
      tpu.vector_store %arg13[%c0_110, %c16_111], %162 {strides = array<i32>} : memref<8x32xf32, #tpu.memory_space<vmem>>, vector<8x8xf32>,
      %c3_112 = arith.constant 3 : index
      %c0_113 = arith.constant 0 : index
      %c0_114 = arith.constant 0 : index
      %164 = vector.load %arg12[%c3_112, %c0_113, %c0_114] : memref<4x8x1xf32, #tpu.memory_space<vmem>>, vector<1x8x1xf32>
      %165 = vector.shape_cast %164 : vector<1x8x1xf32> to vector<8x1xf32>
      %166 = tpu.reciprocal %165 {approx = true} : vector<8x1xf32> -> vector<8x1xf32>
      %c0_115 = arith.constant 0 : index
      %c24_116 = arith.constant 24 : index
      %167 = vector.load %arg13[%c0_115, %c24_116] : memref<8x32xf32, #tpu.memory_space<vmem>>, vector<8x8xf32>
      %168 = vector.broadcast %166 : vector<8x1xf32> to vector<8x8xf32>
      %169 = arith.mulf %167, %168 : vector<8x8xf32>
      %c0_117 = arith.constant 0 : index
      %c24_118 = arith.constant 24 : index
      %170 = vector.load %arg13[%c0_117, %c24_118] : memref<8x32xf32, #tpu.memory_space<vmem>>, vector<8x8xf32>
      tpu.vector_store %arg13[%c0_117, %c24_118], %169 {strides = array<i32>} : memref<8x32xf32, #tpu.memory_space<vmem>>, vector<8x8xf32>,
      %c0_119 = arith.constant 0 : index
      %c0_120 = arith.constant 0 : index
      %171 = vector.load %arg13[%c0_119, %c0_120] : memref<8x32xf32, #tpu.memory_space<vmem>>, vector<8x32xf32>
      %c0_121 = arith.constant 0 : index
      %c0_122 = arith.constant 0 : index
      %c0_123 = arith.constant 0 : index
      %172 = vector.load %arg9[%c0_121, %c0_122, %c0_123] : memref<1x8x32xf32, #tpu.memory_space<vmem>>, vector<1x8x32xf32>
      %173 = vector.shape_cast %172 : vector<1x8x32xf32> to vector<8x32xf32>
      %174 = vector.shape_cast %171 : vector<8x32xf32> to vector<1x8x32xf32>
      tpu.vector_store %arg9[%c0_121, %c0_122, %c0_123], %174 {strides = array<i32>} : memref<1x8x32xf32, #tpu.memory_space<vmem>>, vector<1x8x32xf32>,
    } else {
    }
    return
  }
  func.func @transform_0(%arg0: i32, %arg1: i32, %arg2: i32) -> (i32, i32, i32) {
    %c0_i32 = arith.constant 0 : i32
    %c0_i32_0 = arith.constant 0 : i32
    return %arg0, %arg1, %c0_i32 : i32, i32, i32
  }
  func.func @transform_1(%arg0: i32, %arg1: i32, %arg2: i32) -> (i32, i32, i32) {
    %c0_i32 = arith.constant 0 : i32
    %c0_i32_0 = arith.constant 0 : i32
    return %arg0, %arg2, %c0_i32 : i32, i32, i32
  }
  func.func @transform_2(%arg0: i32, %arg1: i32, %arg2: i32) -> (i32, i32) {
    %c0_i32 = arith.constant 0 : i32
    %c0_i32_0 = arith.constant 0 : i32
    %c0_i32_1 = arith.constant 0 : i32
    return %c0_i32, %c0_i32_0 : i32, i32
  }
  func.func @transform_3(%arg0: i32, %arg1: i32, %arg2: i32) -> (i32, i32) {
    %c0_i32 = arith.constant 0 : i32
    %c0_i32_0 = arith.constant 0 : i32
    %c0_i32_1 = arith.constant 0 : i32
    return %c0_i32, %c0_i32_0 : i32, i32
  }
  func.func @transform_4(%arg0: i32, %arg1: i32, %arg2: i32) -> (i32, i32) {
    %c0_i32 = arith.constant 0 : i32
    %c0_i32_0 = arith.constant 0 : i32
    %c0_i32_1 = arith.constant 0 : i32
    return %c0_i32, %c0_i32_0 : i32, i32
  }
  func.func @transform_5(%arg0: i32, %arg1: i32, %arg2: i32) -> (i32, i32) {
    %c0_i32 = arith.constant 0 : i32
    %c0_i32_0 = arith.constant 0 : i32
    %c0_i32_1 = arith.constant 0 : i32
    return %c0_i32, %c0_i32_0 : i32, i32
  }
  func.func @transform_6(%arg0: i32, %arg1: i32, %arg2: i32) -> (i32, i32, i32) {
    %c0_i32 = arith.constant 0 : i32
    %c0_i32_0 = arith.constant 0 : i32
    return %arg0, %arg1, %c0_i32 : i32, i32, i32
  }
}

</mosaic_0001>

<llo_original>
// kernel: tpu_custom_call.1
$region0: #{tpu_custom_call.1}
  #allocation0 [shape = 'u32[]', space=smem, size = 0x4, offset = 0x4, fixed_abs, tag = 'smem constant byte address 0x4 - core index']
  #allocation1 [shape = 'u32[144,128]{1,0:T(1,128)}', space=vmem, size = 0x12000, scoped, tag = 'internal scratch']
  #allocation2 [shape = 'bf16[8,32]{1,0:T(8,128)(2,1)}', space=vmem, size = 0x800, scoped, tag = 'scratch operand']
  #allocation3 [shape = 'f32[4,8,1]{2,1,0:T(8,128)}', space=vmem, size = 0x4000, scoped, tag = 'scratch operand']
  #allocation4 [shape = 'f32[4,8,1]{2,1,0:T(8,128)}', space=vmem, size = 0x4000, scoped, tag = 'scratch operand']
  #allocation5 [shape = 'f32[8,32]{1,0:T(8,128)}', space=vmem, size = 0x1000, scoped, tag = 'scratch operand']
  %s0 = inlined_call_operand.hbm [shape: f32[2,8,32], index: 0, kind: input, shape index: {}]
  %s1 = inlined_call_operand.hbm [shape: f32[2,8,32], index: 1, kind: input, shape index: {}]
  %s2 = inlined_call_operand.hbm [shape: bf16[32,32], index: 2, kind: input, shape index: {}]
  %s3 = inlined_call_operand.vmem [shape: f32[1,32], index: 3, kind: input, shape index: {}]
  %s4 = inlined_call_operand.hbm [shape: bf16[32,32], index: 4, kind: input, shape index: {}]
  %s5 = inlined_call_operand.vmem [shape: f32[1,32], index: 5, kind: input, shape index: {}]
  %s6 = inlined_call_operand.hbm [shape: f32[2,8,32], index: 6, kind: output, shape index: {}]
  %s7 = sld [smem:[#allocation0]]
  $region81: #{tpu_custom_call.1} parent=0
    _
  %s9 = ssub.s32 1, %s7
  %s10 = scalar_select 0, %s9, %s7
  $region1: #{tpu_custom_call.1} parent=0
    #allocation6 [shape = 'u8[8192]{0}', space=vmem, size = 0x2000, scoped, tag = 'input window, operand 0']
    #allocation7 [shape = 's32[2]{0}', space=sflag, size = 0x8, scoped, tag = 'scoped memory for tpu_custom_call.1']
    #allocation8 [shape = 's32[2]{0}', space=sflag, size = 0x8, scoped, tag = 'scoped memory for tpu_custom_call.1']
    #allocation9 [shape = 'u8[8192]{0}', space=vmem, size = 0x2000, scoped, tag = 'input window, operand 1']
    #allocation10 [shape = 's32[2]{0}', space=sflag, size = 0x8, scoped, tag = 'scoped memory for tpu_custom_call.1']
    #allocation11 [shape = 'u8[8192]{0}', space=vmem, size = 0x2000, scoped, tag = 'input window, operand 2, single buffered']
    #allocation12 [shape = 'u8[8192]{0}', space=vmem, size = 0x2000, scoped, tag = 'input window, operand 4, single buffered']
    #allocation13 [shape = 's32[1]{0}', space=sflag, size = 0x4, scoped, tag = 'scoped memory for tpu_custom_call.1']
    #allocation14 [shape = 'u8[8192]{0}', space=vmem, size = 0x2000, scoped, tag = 'output window, operand 0']
    %11 = vsyncpa [#allocation7], 0
    %s12 = scalar_lea.sflag [#allocation7], 1
    %13 = vsyncpa %s12, 0
    %14 = vsyncpa [#allocation10], 0
    %s15 = scalar_lea.sflag [#allocation10], 1
    %16 = vsyncpa %s15, 0
    %17 = vsyncpa [#allocation13], 0
    %18 = vsyncpa [#allocation8], 0
    %s19 = scalar_lea.sflag [#allocation8], 1
    %20 = vsyncpa %s19, 0
    loop: start=0, step=1, limit=4
    $region2: #{tpu_custom_call.1} parent=1 // loop_pre_header
      _
    $region3: #{tpu_custom_call.1} parent=1 // loop_header
      %s22 = sphi 0, %s26
      %p23 = scmp.ge.s32.totalorder %s22, 4
      %s29 = sphi 0, %s48
      %s30 = sphi 0, %s44
      %s31 = sphi 0, %s40
      %s32 = sphi 0, %s29
      %s33 = sphi 0, %s30
      %s34 = sphi 0, %s31
      %s35 = sphi 0, %s32
      %s36 = sphi 0, %s33
      %s37 = sphi 0, %s34
      %s53 = sphi 0, %s55
      %s56 = sphi 0, %s53
      %s57 = sphi 0, %s56
      %s73 = sphi 0, %s57
      %s81 = sphi 0, %s83
      %s84 = sphi 0, %s81
      %s85 = sphi 0, %s84
      %s101 = sphi 0, %s85
      %s105 = sphi 0, %s105
      %s107 = sphi 0, %s105
      %s108 = sphi 0, %s107
      %s122 = sphi 0, %s108
      %s126 = sphi 0, %s126
      %s128 = sphi 0, %s126
      %s129 = sphi 0, %s128
      %s143 = sphi 0, %s129
      %s147 = sphi 0, %s147
      %s149 = sphi 0, %s147
      %s150 = sphi 0, %s149
      %s164 = sphi 0, %s150
      %s168 = sphi 0, %s168
      %s170 = sphi 0, %s168
      %s171 = sphi 0, %s170
      %s185 = sphi 0, %s171
      %s193 = sphi 0, %s195
      %s196 = sphi 0, %s193
      %s197 = sphi 0, %s196
      %s213 = sphi 0, %s197
    $region4: #{tpu_custom_call.1} parent=1 // loop_header_branch
      %25 = sbr.rel (%p23) target = $region8
    $region5: #{tpu_custom_call.1} parent=1 // loop_body
      %s27 = ssub.s32 %s22, 1
      %s28 = ssub.s32 %s22, 2
      %s38 = sadd.s32 1, %s31
      %p39 = scmp.ge.s32.totalorder %s38, 1
      %s40 = scalar_select %p39, 0, %s38
      %s41 = sadd.s32 1, %s30
      %s42 = scalar_select %p39, %s41, %s30
      %p43 = scmp.ge.s32.totalorder %s42, 1
      %s44 = scalar_select %p43, 0, %s42
      %s45 = sadd.s32 1, %s29
      %s46 = scalar_select %p43, %s45, %s29
      %p47 = scmp.ge.s32.totalorder %s46, 2
      %s48 = scalar_select %p47, 0, %s46
      %s49 = ssub.s32 %s29, %s48
      %s50 = ssub.s32 %s30, %s44
      %s51 = sor.u32 %s49, %s50
      %p52 = scmp.eq.s32.totalorder %s51, 0
      %s54 = sadd.s32 %s53, 1
      %s55 = scalar_select %p52, %s53, %s54
      %p58 = pneg %p52
      %p59 = scmp.eq.s32.totalorder %s22, 1
      %p60 = por %p58, %p59
      %p61 = scmp.ne.s32.totalorder %s53, %s56
      %p62 = scmp.eq.s32.totalorder %s22, 0
      %p63 = por %p61, %p62
      %p64 = scmp.ne.s32.totalorder %s53, %s56
      %p65 = scmp.eq.s32.totalorder %s27, 1
      %p66 = por %p64, %p65
      %p67 = scmp.ne.s32.totalorder %s56, %s57
      %p68 = scmp.eq.s32.totalorder %s27, 0
      %p69 = por %p67, %p68
      %p70 = scmp.ne.s32.totalorder %s56, %s57
      %p71 = scmp.eq.s32.totalorder %s28, 1
      %p72 = por %p70, %p71
      %p74 = scmp.ne.s32.totalorder %s57, %s73
      %p75 = scmp.eq.s32.totalorder %s28, 0
      %p76 = por %p74, %p75
      %s77 = ssub.s32 %s29, %s48
      %s78 = ssub.s32 %s31, %s40
      %s79 = sor.u32 %s77, %s78
      %p80 = scmp.eq.s32.totalorder %s79, 0
      %s82 = sadd.s32 %s81, 1
      %s83 = scalar_select %p80, %s81, %s82
      %p86 = pneg %p80
      %p87 = scmp.eq.s32.totalorder %s22, 1
      %p88 = por %p86, %p87
      %p89 = scmp.ne.s32.totalorder %s81, %s84
      %p90 = scmp.eq.s32.totalorder %s22, 0
      %p91 = por %p89, %p90
      %p92 = scmp.ne.s32.totalorder %s81, %s84
      %p93 = scmp.eq.s32.totalorder %s27, 1
      %p94 = por %p92, %p93
      %p95 = scmp.ne.s32.totalorder %s84, %s85
      %p96 = scmp.eq.s32.totalorder %s27, 0
      %p97 = por %p95, %p96
      %p98 = scmp.ne.s32.totalorder %s84, %s85
      %p99 = scmp.eq.s32.totalorder %s28, 1
      %p100 = por %p98, %p99
      %p102 = scmp.ne.s32.totalorder %s85, %s101
      %p103 = scmp.eq.s32.totalorder %s28, 0
      %p104 = por %p102, %p103
      %s106 = sadd.s32 %s105, 1
      %p109 = scmp.eq.s32.totalorder %s22, 1
      %p110 = scmp.ne.s32.totalorder %s105, %s107
      %p111 = scmp.eq.s32.totalorder %s22, 0
      %p112 = por %p110, %p111
      %p113 = scmp.ne.s32.totalorder %s105, %s107
      %p114 = scmp.eq.s32.totalorder %s27, 1
      %p115 = por %p113, %p114
      %p116 = scmp.ne.s32.totalorder %s107, %s108
      %p117 = scmp.eq.s32.totalorder %s27, 0
      %p118 = por %p116, %p117
      %p119 = scmp.ne.s32.totalorder %s107, %s108
      %p120 = scmp.eq.s32.totalorder %s28, 1
      %p121 = por %p119, %p120
      %p123 = scmp.ne.s32.totalorder %s108, %s122
      %p124 = scmp.eq.s32.totalorder %s28, 0
      %p125 = por %p123, %p124
      %s127 = sadd.s32 %s126, 1
      %p130 = scmp.eq.s32.totalorder %s22, 1
      %p131 = scmp.ne.s32.totalorder %s126, %s128
      %p132 = scmp.eq.s32.totalorder %s22, 0
      %p133 = por %p131, %p132
      %p134 = scmp.ne.s32.totalorder %s126, %s128
      %p135 = scmp.eq.s32.totalorder %s27, 1
      %p136 = por %p134, %p135
      %p137 = scmp.ne.s32.totalorder %s128, %s129
      %p138 = scmp.eq.s32.totalorder %s27, 0
      %p139 = por %p137, %p138
      %p140 = scmp.ne.s32.totalorder %s128, %s129
      %p141 = scmp.eq.s32.totalorder %s28, 1
      %p142 = por %p140, %p141
      %p144 = scmp.ne.s32.totalorder %s129, %s143
      %p145 = scmp.eq.s32.totalorder %s28, 0
      %p146 = por %p144, %p145
      %s148 = sadd.s32 %s147, 1
      %p151 = scmp.eq.s32.totalorder %s22, 1
      %p152 = scmp.ne.s32.totalorder %s147, %s149
      %p153 = scmp.eq.s32.totalorder %s22, 0
      %p154 = por %p152, %p153
      %p155 = scmp.ne.s32.totalorder %s147, %s149
      %p156 = scmp.eq.s32.totalorder %s27, 1
      %p157 = por %p155, %p156
      %p158 = scmp.ne.s32.totalorder %s149, %s150
      %p159 = scmp.eq.s32.totalorder %s27, 0
      %p160 = por %p158, %p159
      %p161 = scmp.ne.s32.totalorder %s149, %s150
      %p162 = scmp.eq.s32.totalorder %s28, 1
      %p163 = por %p161, %p162
      %p165 = scmp.ne.s32.totalorder %s150, %s164
      %p166 = scmp.eq.s32.totalorder %s28, 0
      %p167 = por %p165, %p166
      %s169 = sadd.s32 %s168, 1
      %p172 = scmp.eq.s32.totalorder %s22, 1
      %p173 = scmp.ne.s32.totalorder %s168, %s170
      %p174 = scmp.eq.s32.totalorder %s22, 0
      %p175 = por %p173, %p174
      %p176 = scmp.ne.s32.totalorder %s168, %s170
      %p177 = scmp.eq.s32.totalorder %s27, 1
      %p178 = por %p176, %p177
      %p179 = scmp.ne.s32.totalorder %s170, %s171
      %p180 = scmp.eq.s32.totalorder %s27, 0
      %p181 = por %p179, %p180
      %p182 = scmp.ne.s32.totalorder %s170, %s171
      %p183 = scmp.eq.s32.totalorder %s28, 1
      %p184 = por %p182, %p183
      %p186 = scmp.ne.s32.totalorder %s171, %s185
      %p187 = scmp.eq.s32.totalorder %s28, 0
      %p188 = por %p186, %p187
      %s189 = ssub.s32 %s29, %s48
      %s190 = ssub.s32 %s30, %s44
      %s191 = sor.u32 %s189, %s190
      %p192 = scmp.eq.s32.totalorder %s191, 0
      %s194 = sadd.s32 %s193, 1
      %s195 = scalar_select %p192, %s193, %s194
      %p198 = pneg %p192
      %p199 = scmp.eq.s32.totalorder %s22, 1
      %p200 = por %p198, %p199
      %p201 = scmp.ne.s32.totalorder %s193, %s196
      %p202 = scmp.eq.s32.totalorder %s22, 0
      %p203 = por %p201, %p202
      %p204 = scmp.ne.s32.totalorder %s193, %s196
      %p205 = scmp.eq.s32.totalorder %s27, 1
      %p206 = por %p204, %p205
      %p207 = scmp.ne.s32.totalorder %s196, %s197
      %p208 = scmp.eq.s32.totalorder %s27, 0
      %p209 = por %p207, %p208
      %p210 = scmp.ne.s32.totalorder %s196, %s197
      %p211 = scmp.eq.s32.totalorder %s28, 1
      %p212 = por %p210, %p211
      %p214 = scmp.ne.s32.totalorder %s197, %s213
      %p215 = scmp.eq.s32.totalorder %s28, 0
      %p216 = por %p214, %p215
      %p217 = scmp.le.s32.totalorder 1, %s22
      %p218 = scmp.lt.s32.totalorder %s22, 3
      %p219 = pnand %p217, %p218
      %p220 = pneg %p219
      // Predicated region
      $region9: #{tpu_custom_call.1} parent=5 // pred_check
        _
      $region10: #{tpu_custom_call.1} parent=5 // pred_check_branch
        %222 = sbr.rel (%p219) target = $region12
      $region11: #{tpu_custom_call.1} parent=5 // pred_region
        %s223 = ssub.s32 %s22, 1
        // Predicated region
        $region13: #{tpu_custom_call.1} parent=11 // pred_check
          %p224 = pneg %p118
        $region14: #{tpu_custom_call.1} parent=11 // pred_check_branch
          %226 = sbr.rel (%p224) target = $region16
        $region15: #{tpu_custom_call.1} parent=11 // pred_region
          %s228 = ssub.s32 256, 256
          %229 = vsyncadd [#allocation10], %s228
          %s230 = sshll.u32 [#allocation11], 4
          %s231 = int_to_ptr.vmem [resolvable:$true] %s230
          %236 = dma.hbm_to_vmem [thread:$0]  %s2, 256, %s231, [#allocation10], 64, 64, 4
        $region16: #{tpu_custom_call.1} parent=11 // pred_fallthru
          _
        // Predicated region
        $region17: #{tpu_custom_call.1} parent=11 // pred_check
          %p237 = pneg %p139
        $region18: #{tpu_custom_call.1} parent=11 // pred_check_branch
          %239 = sbr.rel (%p237) target = $region20
        $region19: #{tpu_custom_call.1} parent=11 // pred_region
          _
        $region20: #{tpu_custom_call.1} parent=11 // pred_fallthru
          _
        // Predicated region
        $region21: #{tpu_custom_call.1} parent=11 // pred_check
          %p240 = pneg %p160
        $region22: #{tpu_custom_call.1} parent=11 // pred_check_branch
          %242 = sbr.rel (%p240) target = $region24
        $region23: #{tpu_custom_call.1} parent=11 // pred_region
          %s244 = ssub.s32 256, 256
          %245 = vsyncadd [#allocation13], %s244
          %s246 = sshll.u32 [#allocation12], 4
          %s247 = int_to_ptr.vmem [resolvable:$true] %s246
          %252 = dma.hbm_to_vmem [thread:$0]  %s4, 256, %s247, [#allocation13], 64, 64, 4
        $region24: #{tpu_custom_call.1} parent=11 // pred_fallthru
          _
        // Predicated region
        $region25: #{tpu_custom_call.1} parent=11 // pred_check
          %p253 = pneg %p181
        $region26: #{tpu_custom_call.1} parent=11 // pred_check_branch
          %255 = sbr.rel (%p253) target = $region28
        $region27: #{tpu_custom_call.1} parent=11 // pred_region
          _
        $region28: #{tpu_custom_call.1} parent=11 // pred_fallthru
          _
      $region12: #{tpu_custom_call.1} parent=5 // pred_fallthru
        _
      %p256 = scmp.lt.s32.totalorder %s22, 2
      // Predicated region
      $region29: #{tpu_custom_call.1} parent=5 // pred_check
        %p257 = pneg %p256
      $region30: #{tpu_custom_call.1} parent=5 // pred_check_branch
        %259 = sbr.rel (%p257) target = $region32
      $region31: #{tpu_custom_call.1} parent=5 // pred_region
        // Predicated region
        $region33: #{tpu_custom_call.1} parent=31 // pred_check
          %p260 = pneg %p63
        $region34: #{tpu_custom_call.1} parent=31 // pred_check_branch
          %262 = sbr.rel (%p260) target = $region36
        $region35: #{tpu_custom_call.1} parent=31 // pred_region
          %s263 = sand.u32 %s53, 1
          %s264 = scalar_lea.sflag [#allocation7], %s263
          %s265 = sand.u32 %s53, 1
          %s266 = smul.addr %s265, 8
          %s267 = scalar_lea.vmem [#allocation6], %s266
          %s269 = ssub.s32 128, 128
          %270 = vsyncadd %s264, %s269
          %s271 = sadd.s32 %s30, %s29
          %s272 = smul.addr %s271, 128
          %s273 = scalar_lea.hbm %s0, %s272
          %s275 = sshll.u32 %s267, 4
          %s276 = int_to_ptr.vmem [resolvable:$true] %s275
          %278 = dma.hbm_to_vmem [thread:$0]  %s273, 128, %s276, %s264
        $region36: #{tpu_custom_call.1} parent=31 // pred_fallthru
          _
        // Predicated region
        $region37: #{tpu_custom_call.1} parent=31 // pred_check
          %p279 = pneg %p91
        $region38: #{tpu_custom_call.1} parent=31 // pred_check_branch
          %281 = sbr.rel (%p279) target = $region40
        $region39: #{tpu_custom_call.1} parent=31 // pred_region
          %s282 = sand.u32 %s22, 1
          %s283 = scalar_lea.sflag [#allocation10], %s282
          %s284 = sand.u32 %s81, 1
          %s285 = smul.addr %s284, 8
          %s286 = scalar_lea.vmem [#allocation9], %s285
          %s288 = ssub.s32 128, 128
          %289 = vsyncadd %s283, %s288
          %s290 = sadd.s32 %s31, %s29
          %s291 = smul.addr %s290, 128
          %s292 = scalar_lea.hbm %s1, %s291
          %s294 = sshll.u32 %s286, 4
          %s295 = int_to_ptr.vmem [resolvable:$true] %s294
          %297 = dma.hbm_to_vmem [thread:$0]  %s292, 128, %s295, %s283
        $region40: #{tpu_custom_call.1} parent=31 // pred_fallthru
          _
      $region32: #{tpu_custom_call.1} parent=5 // pred_fallthru
        _
      %p298 = scmp.le.s32.totalorder 1, %s22
      %p299 = scmp.lt.s32.totalorder %s22, 3
      %p300 = pnand %p298, %p299
      %p301 = pneg %p300
      // Predicated region
      $region41: #{tpu_custom_call.1} parent=5 // pred_check
        _
      $region42: #{tpu_custom_call.1} parent=5 // pred_check_branch
        %303 = sbr.rel (%p300) target = $region44
      $region43: #{tpu_custom_call.1} parent=5 // pred_region
        %s304 = ssub.s32 %s22, 1
        %s305 = sand.u32 %s56, 1
        %s306 = scalar_lea.sflag [#allocation7], %s305
        %s307 = sand.u32 %s56, 1
        %s308 = smul.addr %s307, 8
        %s309 = scalar_lea.vmem [#allocation6], %s308
        // Predicated region
        $region45: #{tpu_custom_call.1} parent=43 // pred_check
          %p310 = pneg %p69
        $region46: #{tpu_custom_call.1} parent=43 // pred_check_branch
          %312 = sbr.rel (%p310) target = $region48
        $region47: #{tpu_custom_call.1} parent=43 // pred_region
          %313 = dma.done %s306, 128
        $region48: #{tpu_custom_call.1} parent=43 // pred_fallthru
          _
        %s314 = sand.u32 %s27, 1
        %s315 = scalar_lea.sflag [#allocation10], %s314
        %s316 = sand.u32 %s84, 1
        %s317 = smul.addr %s316, 8
        %s318 = scalar_lea.vmem [#allocation9], %s317
        // Predicated region
        $region49: #{tpu_custom_call.1} parent=43 // pred_check
          %p319 = pneg %p97
        $region50: #{tpu_custom_call.1} parent=43 // pred_check_branch
          %321 = sbr.rel (%p319) target = $region52
        $region51: #{tpu_custom_call.1} parent=43 // pred_region
          %322 = dma.done %s315, 128
        $region52: #{tpu_custom_call.1} parent=43 // pred_fallthru
          _
        // Predicated region
        $region53: #{tpu_custom_call.1} parent=43 // pred_check
          %p323 = pneg %p118
        $region54: #{tpu_custom_call.1} parent=43 // pred_check_branch
          %325 = sbr.rel (%p323) target = $region56
        $region55: #{tpu_custom_call.1} parent=43 // pred_region
          %326 = dma.done [#allocation10], 256
        $region56: #{tpu_custom_call.1} parent=43 // pred_fallthru
          _
        // Predicated region
        $region57: #{tpu_custom_call.1} parent=43 // pred_check
          %p327 = pneg %p160
        $region58: #{tpu_custom_call.1} parent=43 // pred_check_branch
          %329 = sbr.rel (%p327) target = $region60
        $region59: #{tpu_custom_call.1} parent=43 // pred_region
          %330 = dma.done [#allocation13], 256
        $region60: #{tpu_custom_call.1} parent=43 // pred_fallthru
          _
        %s331 = sand.u32 %s56, 1
        %s332 = scalar_lea.sflag [#allocation7], %s331
        %s333 = sand.u32 %s56, 1
        %s334 = smul.addr %s333, 8
        %s335 = scalar_lea.vmem [#allocation6], %s334
        %p336 = pneg %p69
        %p337 = pneg %p66
        %s338 = sand.u32 %s27, 1
        %s339 = scalar_lea.sflag [#allocation10], %s338
        %s340 = sand.u32 %s84, 1
        %s341 = smul.addr %s340, 8
        %s342 = scalar_lea.vmem [#allocation9], %s341
        %p343 = pneg %p97
        %p344 = pneg %p94
        %p345 = pneg %p118
        %p346 = pneg %p115
        %p347 = pneg %p139
        %p348 = pneg %p136
        %p349 = pneg %p160
        %p350 = pneg %p157
        %p351 = pneg %p181
        %p352 = pneg %p178
        %p353 = pneg %p209
        %p354 = pneg %p206
        %s355 = sand.u32 %s196, 1
        %s356 = scalar_lea.sflag [#allocation8], %s355
        %s357 = sand.u32 %s196, 1
        %s358 = smul.addr %s357, 8
        %s359 = scalar_lea.vmem [#allocation14], %s358
        %p361 = scmp.eq.s32.totalorder %s34, 0
        // Predicated region
        $region61: #{tpu_custom_call.1} parent=43 // pred_check
          %p362 = pneg %p361
        $region62: #{tpu_custom_call.1} parent=43 // pred_check_branch
          %364 = sbr.rel (%p362) target = $region64
        $region63: #{tpu_custom_call.1} parent=43 // pred_region
          %v365 = vld [vmem:[%s309] sm:$0xff]
          %v366 = vpack.c.bf16 %v365, %v365
          %v367 = vld [vmem:[#allocation11] sm:$0xf]
          %v368 = vld [vmem:[#allocation11 + $0x4] sm:$0xf]
          %v369 = vld [vmem:[#allocation11 + $0x8] sm:$0xf]
          %v370 = vld [vmem:[#allocation11 + $0xc] sm:$0xf]
          %v371 = vld [vmem:[%s3] sm:$0x1]
          %v373 = vlaneseq
          %v374 = vshrl.u32 %v373, 7
          %v375 = vsub.s32 0, %v374
          %v376 = vrot.slane %v371, %v375
          %v382 = vunpack.c.l.b16 %v367
          %v383 = vunpack.c.l.b16 %v368
          %v384 = vunpack.c.l.b16 %v369
          %v385 = vunpack.c.l.b16 %v370
          %v386 = vpack.c.b16 %v383, %v382
          %v387 = vpack.c.b16 %v385, %v384
          %vm390 = vcmask 261120
          %v392 = vsel %vm390, %v366, 0
          %394 = vmatprep.subr.bf16.mxu0 0
          %395 = vmatpush1.bf16.msra.mxu0 %v386
          %396 = vmatprep.subr.bf16.mxu0 0
          %397 = vmatpush1.bf16.msra.mxu0 %v387
          %398 = vmatprep.subr.bf16.mxu0 0
          %399 = vmatpush1.bf16.msra.mxu0 0
          %400 = vmatprep.subr.bf16.mxu0 0
          %401 = vmatpush1.bf16.msra.mxu0 0
          %402 = vmatprep.subr.bf16.mxu0 0
          %403 = vmatpush1.bf16.msra.mxu0 0
          %404 = vmatprep.subr.bf16.mxu0 0
          %405 = vmatpush1.bf16.msra.mxu0 0
          %406 = vmatprep.subr.bf16.mxu0 0
          %407 = vmatpush1.bf16.msra.mxu0 0
          %408 = vmatprep.subr.bf16.mxu0 0
          %409 = vmatpush1.bf16.msra.mxu0 0
          %410 = vmatprep.subr.bf16.mxu0 0
          %411 = vmatpush1.bf16.msra.mxu0 0
          %412 = vmatprep.subr.bf16.mxu0 0
          %413 = vmatpush1.bf16.msra.mxu0 0
          %414 = vmatprep.subr.bf16.mxu0 0
          %415 = vmatpush1.bf16.msra.mxu0 0
          %416 = vmatprep.subr.bf16.mxu0 0
          %417 = vmatpush1.bf16.msra.mxu0 0
          %418 = vmatprep.subr.bf16.mxu0 0
          %419 = vmatpush1.bf16.msra.mxu0 0
          %420 = vmatprep.subr.bf16.mxu0 0
          %421 = vmatpush1.bf16.msra.mxu0 0
          %422 = vmatprep.subr.bf16.mxu0 0
          %423 = vmatpush1.bf16.msra.mxu0 0
          %424 = vmatprep.subr.bf16.mxu0 0
          %425 = vmatpush1.bf16.msra.mxu0 0
          %426 = vmatprep.mubr.bf16.mxu0 0
          %427 = vmatmul.mubr.bf16.gmra.mrb[0].mxu0 %v392
          %v428 = vpop.f32.mrb[0].mxu0
          %v429 = vadd.f32 %v376, %v428
          %v430 = vpop.f32.mrb[0].mxu0
          %v431 = vpop.f32.mrb[0].mxu0
          %v432 = vpop.f32.mrb[0].mxu0
          %433 = vdwg.mxu0
          %v434 = vpack.c.bf16 %v429, %v429
          %vm435 = vcmask 257024
          %436 = vst.msk [vmem:[#allocation2] sm:$0xf] %vm435, %v434
          %vm437 = vcmask 7168
          %438 = vst.msk [vmem:[#allocation3] sm:$0xff] %vm437, -inf
          %439 = vst.msk [vmem:[#allocation3 + $0x8] sm:$0xff] %vm437, -inf
          %440 = vst.msk [vmem:[#allocation3 + $0x10] sm:$0xff] %vm437, -inf
          %441 = vst.msk [vmem:[#allocation3 + $0x18] sm:$0xff] %vm437, -inf
          %442 = vst.msk [vmem:[#allocation4] sm:$0xff] %vm437, 0.0
          %443 = vst.msk [vmem:[#allocation4 + $0x8] sm:$0xff] %vm437, 0.0
          %444 = vst.msk [vmem:[#allocation4 + $0x10] sm:$0xff] %vm437, 0.0
          %445 = vst.msk [vmem:[#allocation4 + $0x18] sm:$0xff] %vm437, 0.0
          %446 = vst.msk [vmem:[#allocation5] sm:$0xff] %vm390, 0.0
        $region64: #{tpu_custom_call.1} parent=43 // pred_fallthru
          _
        %v447 = vld [vmem:[%s318] sm:$0xff]
        %v448 = vpack.c.bf16 %v447, %v447
        %v449 = vld [vmem:[#allocation12] sm:$0xf]
        %v450 = vld [vmem:[#allocation12 + $0x4] sm:$0xf]
        %v451 = vld [vmem:[#allocation12 + $0x8] sm:$0xf]
        %v452 = vld [vmem:[#allocation12 + $0xc] sm:$0xf]
        %v453 = vld [vmem:[%s5] sm:$0x1]
        %v455 = vlaneseq
        %v456 = vshrl.u32 %v455, 7
        %v457 = vsub.s32 0, %v456
        %v458 = vrot.slane %v453, %v457
        %v464 = vunpack.c.l.b16 %v449
        %v465 = vunpack.c.l.b16 %v450
        %v466 = vunpack.c.l.b16 %v451
        %v467 = vunpack.c.l.b16 %v452
        %v468 = vpack.c.b16 %v465, %v464
        %v469 = vpack.c.b16 %v467, %v466
        %vm472 = vcmask 261120
        %v474 = vsel %vm472, %v448, 0
        %476 = vmatprep.subr.bf16.mxu0 0
        %477 = vmatpush1.bf16.msra.mxu0 %v468
        %478 = vmatprep.subr.bf16.mxu0 0
        %479 = vmatpush1.bf16.msra.mxu0 %v469
        %480 = vmatprep.subr.bf16.mxu0 0
        %481 = vmatpush1.bf16.msra.mxu0 0
        %482 = vmatprep.subr.bf16.mxu0 0
        %483 = vmatpush1.bf16.msra.mxu0 0
        %484 = vmatprep.subr.bf16.mxu0 0
        %485 = vmatpush1.bf16.msra.mxu0 0
        %486 = vmatprep.subr.bf16.mxu0 0
        %487 = vmatpush1.bf16.msra.mxu0 0
        %488 = vmatprep.subr.bf16.mxu0 0
        %489 = vmatpush1.bf16.msra.mxu0 0
        %490 = vmatprep.subr.bf16.mxu0 0
        %491 = vmatpush1.bf16.msra.mxu0 0
        %492 = vmatprep.subr.bf16.mxu0 0
        %493 = vmatpush1.bf16.msra.mxu0 0
        %494 = vmatprep.subr.bf16.mxu0 0
        %495 = vmatpush1.bf16.msra.mxu0 0
        %496 = vmatprep.subr.bf16.mxu0 0
        %497 = vmatpush1.bf16.msra.mxu0 0
        %498 = vmatprep.subr.bf16.mxu0 0
        %499 = vmatpush1.bf16.msra.mxu0 0
        %500 = vmatprep.subr.bf16.mxu0 0
        %501 = vmatpush1.bf16.msra.mxu0 0
        %502 = vmatprep.subr.bf16.mxu0 0
        %503 = vmatpush1.bf16.msra.mxu0 0
        %504 = vmatprep.subr.bf16.mxu0 0
        %505 = vmatpush1.bf16.msra.mxu0 0
        %506 = vmatprep.subr.bf16.mxu0 0
        %507 = vmatpush1.bf16.msra.mxu0 0
        %508 = vmatprep.mubr.bf16.mxu0 0
        %509 = vmatmul.mubr.bf16.gmra.mrb[0].mxu0 %v474
        %v510 = vpop.f32.mrb[0].mxu0
        %v511 = vadd.f32 %v458, %v510
        %v512 = vpop.f32.mrb[0].mxu0
        %v513 = vpop.f32.mrb[0].mxu0
        %v514 = vpop.f32.mrb[0].mxu0
        %515 = vdwg.mxu0
        %v516 = vpack.c.bf16 %v511, %v511
        %v517 = vld [vmem:[#allocation2] sm:$0xf]
        %vm518 = vcmask 64512
        %v520 = vsel %vm518, %v517, 0
        %v523 = vsel %vm518, %v516, 0
        %525 = vmatprep.subr.bf16.mxu0 0
        %526 = vmatpush1.bf16.xpose.msra.mxu0 %v523
        %527 = vmatprep.subr.bf16.mxu0 0
        %528 = vmatpush1.bf16.xpose.msra.mxu0 0
        %529 = vmatprep.subr.bf16.mxu0 0
        %530 = vmatpush1.bf16.xpose.msra.mxu0 0
        %531 = vmatprep.subr.bf16.mxu0 0
        %532 = vmatpush1.bf16.xpose.msra.mxu0 0
        %533 = vmatprep.subr.bf16.mxu0 0
        %534 = vmatpush1.bf16.xpose.msra.mxu0 0
        %535 = vmatprep.subr.bf16.mxu0 0
        %536 = vmatpush1.bf16.xpose.msra.mxu0 0
        %537 = vmatprep.subr.bf16.mxu0 0
        %538 = vmatpush1.bf16.xpose.msra.mxu0 0
        %539 = vmatprep.subr.bf16.mxu0 0
        %540 = vmatpush1.bf16.xpose.msra.mxu0 0
        %541 = vmatprep.subr.bf16.mxu0 0
        %542 = vmatpush1.bf16.xpose.msra.mxu0 0
        %543 = vmatprep.subr.bf16.mxu0 0
        %544 = vmatpush1.bf16.xpose.msra.mxu0 0
        %545 = vmatprep.subr.bf16.mxu0 0
        %546 = vmatpush1.bf16.xpose.msra.mxu0 0
        %547 = vmatprep.subr.bf16.mxu0 0
        %548 = vmatpush1.bf16.xpose.msra.mxu0 0
        %549 = vmatprep.subr.bf16.mxu0 0
        %550 = vmatpush1.bf16.xpose.msra.mxu0 0
        %551 = vmatprep.subr.bf16.mxu0 0
        %552 = vmatpush1.bf16.xpose.msra.mxu0 0
        %553 = vmatprep.subr.bf16.mxu0 0
        %554 = vmatpush1.bf16.xpose.msra.mxu0 0
        %555 = vmatprep.subr.bf16.mxu0 0
        %556 = vmatpush1.bf16.xpose.msra.mxu0 0
        %557 = vmatprep.mubr.bf16.mxu0 0
        %558 = vmatmul.mubr.bf16.gmra.mrb[0].mxu0 %v520
        %v559 = vpop.f32.mrb[0].mxu0
        %v560 = vadd.f32 0.0, %v559
        %v561 = vpop.f32.mrb[0].mxu0
        %v562 = vpop.f32.mrb[0].mxu0
        %v563 = vpop.f32.mrb[0].mxu0
        %564 = vdwg.mxu0
        %v565 = vld [vmem:[#allocation3] sm:$0xff]
        %v566 = vsel %vm518, %v560, -inf
        %567 = vmax.xlane.f32.xlu0 %v566
        %v568 = vpop.xlane.xlu0 %567
        %v569 = vmax.f32 %v565, %v568
        %v570 = vsub.f32 %v565, %v569
        %v571 = vmul.f32 %v570, 1.442695
        %v572 = vpow.pop %v571
        %574 = vset.pattern.permute.xlu0 0
        %575 = vperm.xlu0 %574, %v569
        %v576 = vpop.permute.xlu0 %575
        %v578 = vsub.f32 %v560, %v576
        %v579 = vmul.f32 %v578, 1.442695
        %v580 = vpow.pop %v579
        %v581 = vld [vmem:[#allocation4] sm:$0xff]
        %v582 = vmul.f32 %v572, %v581
        %v583 = vsel %vm518, %v580, 0.0
        %584 = vadd.xlane.f32.xlu0 %v583
        %v585 = vpop.xlane.xlu0 %584
        %v586 = vadd.f32 %v582, %v585
        %vm587 = vcmask 7168
        %588 = vst.msk [vmem:[#allocation4] sm:$0xff] %vm587, %v586
        %v589 = vld [vmem:[#allocation5] sm:$0xff]
        %591 = vset.pattern.permute.xlu0 0
        %592 = vperm.xlu0 %591, %v572
        %v593 = vpop.permute.xlu0 %592
        %v595 = vmul.f32 %v593, %v589
        %v596 = vpack.c.bf16 %v580, %v580
        %v598 = vsel %vm518, %v596, 0
        %vm600 = vcmask 1043456
        %v601 = vsel %vm600, %v516, 0
        %603 = vmatprep.subr.bf16.mxu0 0
        %604 = vmatpush1.bf16.msra.mxu0 %v601
        %605 = vmatprep.subr.bf16.mxu0 0
        %606 = vmatpush1.bf16.msra.mxu0 0
        %607 = vmatprep.subr.bf16.mxu0 0
        %608 = vmatpush1.bf16.msra.mxu0 0
        %609 = vmatprep.subr.bf16.mxu0 0
        %610 = vmatpush1.bf16.msra.mxu0 0
        %611 = vmatprep.subr.bf16.mxu0 0
        %612 = vmatpush1.bf16.msra.mxu0 0
        %613 = vmatprep.subr.bf16.mxu0 0
        %614 = vmatpush1.bf16.msra.mxu0 0
        %615 = vmatprep.subr.bf16.mxu0 0
        %616 = vmatpush1.bf16.msra.mxu0 0
        %617 = vmatprep.subr.bf16.mxu0 0
        %618 = vmatpush1.bf16.msra.mxu0 0
        %619 = vmatprep.subr.bf16.mxu0 0
        %620 = vmatpush1.bf16.msra.mxu0 0
        %621 = vmatprep.subr.bf16.mxu0 0
        %622 = vmatpush1.bf16.msra.mxu0 0
        %623 = vmatprep.subr.bf16.mxu0 0
        %624 = vmatpush1.bf16.msra.mxu0 0
        %625 = vmatprep.subr.bf16.mxu0 0
        %626 = vmatpush1.bf16.msra.mxu0 0
        %627 = vmatprep.subr.bf16.mxu0 0
        %628 = vmatpush1.bf16.msra.mxu0 0
        %629 = vmatprep.subr.bf16.mxu0 0
        %630 = vmatpush1.bf16.msra.mxu0 0
        %631 = vmatprep.subr.bf16.mxu0 0
        %632 = vmatpush1.bf16.msra.mxu0 0
        %633 = vmatprep.subr.bf16.mxu0 0
        %634 = vmatpush1.bf16.msra.mxu0 0
        %635 = vmatprep.mubr.bf16.mxu0 0
        %636 = vmatmul.mubr.bf16.gmra.mrb[0].mxu0 %v598
        %v637 = vpop.f32.mrb[0].mxu0
        %v638 = vadd.f32 0.0, %v637
        %v639 = vpop.f32.mrb[0].mxu0
        %v640 = vpop.f32.mrb[0].mxu0
        %v641 = vpop.f32.mrb[0].mxu0
        %642 = vdwg.mxu0
        %v643 = vadd.f32 %v595, %v638
        %644 = vst.msk [vmem:[#allocation5] sm:$0xff] %vm518, %v643
        %645 = vst.msk [vmem:[#allocation3] sm:$0xff] %vm587, %v569
        %v646 = vld [vmem:[#allocation2] sm:$0xf]
        %v648 = vunpack.c.l.b16 %v646
        %v649 = vpack.c.b16 %v648, %v648
        %650 = vrot.lane.b32.xlu0 %v649, 120
        %v651 = vpop.permute.xlu0 %650
        %653 = vrot.lane.b32.xlu0 %v516, 120
        %v654 = vpop.permute.xlu0 %653
        %v656 = vsel %vm518, %v651, 0
        %v659 = vsel %vm518, %v654, 0
        %661 = vmatprep.subr.bf16.mxu0 0
        %662 = vmatpush1.bf16.xpose.msra.mxu0 %v659
        %663 = vmatprep.subr.bf16.mxu0 0
        %664 = vmatpush1.bf16.xpose.msra.mxu0 0
        %665 = vmatprep.subr.bf16.mxu0 0
        %666 = vmatpush1.bf16.xpose.msra.mxu0 0
        %667 = vmatprep.subr.bf16.mxu0 0
        %668 = vmatpush1.bf16.xpose.msra.mxu0 0
        %669 = vmatprep.subr.bf16.mxu0 0
        %670 = vmatpush1.bf16.xpose.msra.mxu0 0
        %671 = vmatprep.subr.bf16.mxu0 0
        %672 = vmatpush1.bf16.xpose.msra.mxu0 0
        %673 = vmatprep.subr.bf16.mxu0 0
        %674 = vmatpush1.bf16.xpose.msra.mxu0 0
        %675 = vmatprep.subr.bf16.mxu0 0
        %676 = vmatpush1.bf16.xpose.msra.mxu0 0
        %677 = vmatprep.subr.bf16.mxu0 0
        %678 = vmatpush1.bf16.xpose.msra.mxu0 0
        %679 = vmatprep.subr.bf16.mxu0 0
        %680 = vmatpush1.bf16.xpose.msra.mxu0 0
        %681 = vmatprep.subr.bf16.mxu0 0
        %682 = vmatpush1.bf16.xpose.msra.mxu0 0
        %683 = vmatprep.subr.bf16.mxu0 0
        %684 = vmatpush1.bf16.xpose.msra.mxu0 0
        %685 = vmatprep.subr.bf16.mxu0 0
        %686 = vmatpush1.bf16.xpose.msra.mxu0 0
        %687 = vmatprep.subr.bf16.mxu0 0
        %688 = vmatpush1.bf16.xpose.msra.mxu0 0
        %689 = vmatprep.subr.bf16.mxu0 0
        %690 = vmatpush1.bf16.xpose.msra.mxu0 0
        %691 = vmatprep.subr.bf16.mxu0 0
        %692 = vmatpush1.bf16.xpose.msra.mxu0 0
        %693 = vmatprep.mubr.bf16.mxu0 0
        %694 = vmatmul.mubr.bf16.gmra.mrb[0].mxu0 %v656
        %v695 = vpop.f32.mrb[0].mxu0
        %v696 = vadd.f32 0.0, %v695
        %v697 = vpop.f32.mrb[0].mxu0
        %v698 = vpop.f32.mrb[0].mxu0
        %v699 = vpop.f32.mrb[0].mxu0
        %700 = vdwg.mxu0
        %s701 = scalar_lea.vmem [#allocation3], 8
        %v702 = vld [vmem:[%s701] sm:$0xff]
        %v703 = vsel %vm518, %v696, -inf
        %704 = vmax.xlane.f32.xlu0 %v703
        %v705 = vpop.xlane.xlu0 %704
        %v706 = vmax.f32 %v702, %v705
        %v707 = vsub.f32 %v702, %v706
        %v708 = vmul.f32 %v707, 1.442695
        %v709 = vpow.pop %v708
        %711 = vset.pattern.permute.xlu0 0
        %712 = vperm.xlu0 %711, %v706
        %v713 = vpop.permute.xlu0 %712
        %v715 = vsub.f32 %v696, %v713
        %v716 = vmul.f32 %v715, 1.442695
        %v717 = vpow.pop %v716
        %s718 = scalar_lea.vmem [#allocation4], 8
        %v719 = vld [vmem:[%s718] sm:$0xff]
        %v720 = vmul.f32 %v709, %v719
        %v721 = vsel %vm518, %v717, 0.0
        %722 = vadd.xlane.f32.xlu0 %v721
        %v723 = vpop.xlane.xlu0 %722
        %v724 = vadd.f32 %v720, %v723
        %725 = vst.msk [vmem:[%s718] sm:$0xff] %vm587, %v724
        %v726 = vld [vmem:[#allocation5] sm:$0xff]
        %728 = vset.pattern.permute.xlu0 0
        %729 = vperm.xlu0 %728, %v709
        %v730 = vpop.permute.xlu0 %729
        %v732 = vmul.f32 %v730, %v726
        %v733 = vpack.c.bf16 %v717, %v717
        %v735 = vsel %vm518, %v733, 0
        %v737 = vsel %vm600, %v654, 0
        %739 = vmatprep.subr.bf16.mxu0 0
        %740 = vmatpush1.bf16.msra.mxu0 %v737
        %741 = vmatprep.subr.bf16.mxu0 0
        %742 = vmatpush1.bf16.msra.mxu0 0
        %743 = vmatprep.subr.bf16.mxu0 0
        %744 = vmatpush1.bf16.msra.mxu0 0
        %745 = vmatprep.subr.bf16.mxu0 0
        %746 = vmatpush1.bf16.msra.mxu0 0
        %747 = vmatprep.subr.bf16.mxu0 0
        %748 = vmatpush1.bf16.msra.mxu0 0
        %749 = vmatprep.subr.bf16.mxu0 0
        %750 = vmatpush1.bf16.msra.mxu0 0
        %751 = vmatprep.subr.bf16.mxu0 0
        %752 = vmatpush1.bf16.msra.mxu0 0
        %753 = vmatprep.subr.bf16.mxu0 0
        %754 = vmatpush1.bf16.msra.mxu0 0
        %755 = vmatprep.subr.bf16.mxu0 0
        %756 = vmatpush1.bf16.msra.mxu0 0
        %757 = vmatprep.subr.bf16.mxu0 0
        %758 = vmatpush1.bf16.msra.mxu0 0
        %759 = vmatprep.subr.bf16.mxu0 0
        %760 = vmatpush1.bf16.msra.mxu0 0
        %761 = vmatprep.subr.bf16.mxu0 0
        %762 = vmatpush1.bf16.msra.mxu0 0
        %763 = vmatprep.subr.bf16.mxu0 0
        %764 = vmatpush1.bf16.msra.mxu0 0
        %765 = vmatprep.subr.bf16.mxu0 0
        %766 = vmatpush1.bf16.msra.mxu0 0
        %767 = vmatprep.subr.bf16.mxu0 0
        %768 = vmatpush1.bf16.msra.mxu0 0
        %769 = vmatprep.subr.bf16.mxu0 0
        %770 = vmatpush1.bf16.msra.mxu0 0
        %771 = vmatprep.mubr.bf16.mxu0 0
        %772 = vmatmul.mubr.bf16.gmra.mrb[0].mxu0 %v735
        %v773 = vpop.f32.mrb[0].mxu0
        %v774 = vadd.f32 0.0, %v773
        %v775 = vpop.f32.mrb[0].mxu0
        %v776 = vpop.f32.mrb[0].mxu0
        %v777 = vpop.f32.mrb[0].mxu0
        %778 = vdwg.mxu0
        %780 = vrot.lane.b32.xlu0 %v774, 8
        %v781 = vpop.permute.xlu0 %780
        %v783 = vadd.f32 %v732, %v781
        %vm784 = vcmask 130112
        %785 = vst.msk [vmem:[#allocation5] sm:$0xff] %vm784, %v783
        %786 = vst.msk [vmem:[%s701] sm:$0xff] %vm587, %v706
        %v787 = vld [vmem:[#allocation2] sm:$0xf]
        %v789 = vunpack.c.l.b16 %v787
        %v790 = vpack.c.b16 %v789, %v789
        %791 = vrot.lane.b32.xlu0 %v790, 112
        %v792 = vpop.permute.xlu0 %791
        %793 = vrot.lane.b32.xlu0 %v516, 112
        %v794 = vpop.permute.xlu0 %793
        %v796 = vsel %vm518, %v792, 0
        %v799 = vsel %vm518, %v794, 0
        %801 = vmatprep.subr.bf16.mxu0 0
        %802 = vmatpush1.bf16.xpose.msra.mxu0 %v799
        %803 = vmatprep.subr.bf16.mxu0 0
        %804 = vmatpush1.bf16.xpose.msra.mxu0 0
        %805 = vmatprep.subr.bf16.mxu0 0
        %806 = vmatpush1.bf16.xpose.msra.mxu0 0
        %807 = vmatprep.subr.bf16.mxu0 0
        %808 = vmatpush1.bf16.xpose.msra.mxu0 0
        %809 = vmatprep.subr.bf16.mxu0 0
        %810 = vmatpush1.bf16.xpose.msra.mxu0 0
        %811 = vmatprep.subr.bf16.mxu0 0
        %812 = vmatpush1.bf16.xpose.msra.mxu0 0
        %813 = vmatprep.subr.bf16.mxu0 0
        %814 = vmatpush1.bf16.xpose.msra.mxu0 0
        %815 = vmatprep.subr.bf16.mxu0 0
        %816 = vmatpush1.bf16.xpose.msra.mxu0 0
        %817 = vmatprep.subr.bf16.mxu0 0
        %818 = vmatpush1.bf16.xpose.msra.mxu0 0
        %819 = vmatprep.subr.bf16.mxu0 0
        %820 = vmatpush1.bf16.xpose.msra.mxu0 0
        %821 = vmatprep.subr.bf16.mxu0 0
        %822 = vmatpush1.bf16.xpose.msra.mxu0 0
        %823 = vmatprep.subr.bf16.mxu0 0
        %824 = vmatpush1.bf16.xpose.msra.mxu0 0
        %825 = vmatprep.subr.bf16.mxu0 0
        %826 = vmatpush1.bf16.xpose.msra.mxu0 0
        %827 = vmatprep.subr.bf16.mxu0 0
        %828 = vmatpush1.bf16.xpose.msra.mxu0 0
        %829 = vmatprep.subr.bf16.mxu0 0
        %830 = vmatpush1.bf16.xpose.msra.mxu0 0
        %831 = vmatprep.subr.bf16.mxu0 0
        %832 = vmatpush1.bf16.xpose.msra.mxu0 0
        %833 = vmatprep.mubr.bf16.mxu0 0
        %834 = vmatmul.mubr.bf16.gmra.mrb[0].mxu0 %v796
        %v835 = vpop.f32.mrb[0].mxu0
        %v836 = vadd.f32 0.0, %v835
        %v837 = vpop.f32.mrb[0].mxu0
        %v838 = vpop.f32.mrb[0].mxu0
        %v839 = vpop.f32.mrb[0].mxu0
        %840 = vdwg.mxu0
        %s841 = scalar_lea.vmem [#allocation3], 16
        %v842 = vld [vmem:[%s841] sm:$0xff]
        %v843 = vsel %vm518, %v836, -inf
        %844 = vmax.xlane.f32.xlu0 %v843
        %v845 = vpop.xlane.xlu0 %844
        %v846 = vmax.f32 %v842, %v845
        %v847 = vsub.f32 %v842, %v846
        %v848 = vmul.f32 %v847, 1.442695
        %v849 = vpow.pop %v848
        %851 = vset.pattern.permute.xlu0 0
        %852 = vperm.xlu0 %851, %v846
        %v853 = vpop.permute.xlu0 %852
        %v855 = vsub.f32 %v836, %v853
        %v856 = vmul.f32 %v855, 1.442695
        %v857 = vpow.pop %v856
        %s858 = scalar_lea.vmem [#allocation4], 16
        %v859 = vld [vmem:[%s858] sm:$0xff]
        %v860 = vmul.f32 %v849, %v859
        %v861 = vsel %vm518, %v857, 0.0
        %862 = vadd.xlane.f32.xlu0 %v861
        %v863 = vpop.xlane.xlu0 %862
        %v864 = vadd.f32 %v860, %v863
        %865 = vst.msk [vmem:[%s858] sm:$0xff] %vm587, %v864
        %v866 = vld [vmem:[#allocation5] sm:$0xff]
        %868 = vset.pattern.permute.xlu0 0
        %869 = vperm.xlu0 %868, %v849
        %v870 = vpop.permute.xlu0 %869
        %v872 = vmul.f32 %v870, %v866
        %v873 = vpack.c.bf16 %v857, %v857
        %v875 = vsel %vm518, %v873, 0
        %v877 = vsel %vm600, %v794, 0
        %879 = vmatprep.subr.bf16.mxu0 0
        %880 = vmatpush1.bf16.msra.mxu0 %v877
        %881 = vmatprep.subr.bf16.mxu0 0
        %882 = vmatpush1.bf16.msra.mxu0 0
        %883 = vmatprep.subr.bf16.mxu0 0
        %884 = vmatpush1.bf16.msra.mxu0 0
        %885 = vmatprep.subr.bf16.mxu0 0
        %886 = vmatpush1.bf16.msra.mxu0 0
        %887 = vmatprep.subr.bf16.mxu0 0
        %888 = vmatpush1.bf16.msra.mxu0 0
        %889 = vmatprep.subr.bf16.mxu0 0
        %890 = vmatpush1.bf16.msra.mxu0 0
        %891 = vmatprep.subr.bf16.mxu0 0
        %892 = vmatpush1.bf16.msra.mxu0 0
        %893 = vmatprep.subr.bf16.mxu0 0
        %894 = vmatpush1.bf16.msra.mxu0 0
        %895 = vmatprep.subr.bf16.mxu0 0
        %896 = vmatpush1.bf16.msra.mxu0 0
        %897 = vmatprep.subr.bf16.mxu0 0
        %898 = vmatpush1.bf16.msra.mxu0 0
        %899 = vmatprep.subr.bf16.mxu0 0
        %900 = vmatpush1.bf16.msra.mxu0 0
        %901 = vmatprep.subr.bf16.mxu0 0
        %902 = vmatpush1.bf16.msra.mxu0 0
        %903 = vmatprep.subr.bf16.mxu0 0
        %904 = vmatpush1.bf16.msra.mxu0 0
        %905 = vmatprep.subr.bf16.mxu0 0
        %906 = vmatpush1.bf16.msra.mxu0 0
        %907 = vmatprep.subr.bf16.mxu0 0
        %908 = vmatpush1.bf16.msra.mxu0 0
        %909 = vmatprep.subr.bf16.mxu0 0
        %910 = vmatpush1.bf16.msra.mxu0 0
        %911 = vmatprep.mubr.bf16.mxu0 0
        %912 = vmatmul.mubr.bf16.gmra.mrb[0].mxu0 %v875
        %v913 = vpop.f32.mrb[0].mxu0
        %v914 = vadd.f32 0.0, %v913
        %v915 = vpop.f32.mrb[0].mxu0
        %v916 = vpop.f32.mrb[0].mxu0
        %v917 = vpop.f32.mrb[0].mxu0
        %918 = vdwg.mxu0
        %920 = vrot.lane.b32.xlu0 %v914, 16
        %v921 = vpop.permute.xlu0 %920
        %v923 = vadd.f32 %v872, %v921
        %vm924 = vcmask 195712
        %925 = vst.msk [vmem:[#allocation5] sm:$0xff] %vm924, %v923
        %926 = vst.msk [vmem:[%s841] sm:$0xff] %vm587, %v846
        %v927 = vld [vmem:[#allocation2] sm:$0xf]
        %v929 = vunpack.c.l.b16 %v927
        %v930 = vpack.c.b16 %v929, %v929
        %931 = vrot.lane.b32.xlu0 %v930, 104
        %v932 = vpop.permute.xlu0 %931
        %933 = vrot.lane.b32.xlu0 %v516, 104
        %v934 = vpop.permute.xlu0 %933
        %v936 = vsel %vm518, %v932, 0
        %v939 = vsel %vm518, %v934, 0
        %941 = vmatprep.subr.bf16.mxu0 0
        %942 = vmatpush1.bf16.xpose.msra.mxu0 %v939
        %943 = vmatprep.subr.bf16.mxu0 0
        %944 = vmatpush1.bf16.xpose.msra.mxu0 0
        %945 = vmatprep.subr.bf16.mxu0 0
        %946 = vmatpush1.bf16.xpose.msra.mxu0 0
        %947 = vmatprep.subr.bf16.mxu0 0
        %948 = vmatpush1.bf16.xpose.msra.mxu0 0
        %949 = vmatprep.subr.bf16.mxu0 0
        %950 = vmatpush1.bf16.xpose.msra.mxu0 0
        %951 = vmatprep.subr.bf16.mxu0 0
        %952 = vmatpush1.bf16.xpose.msra.mxu0 0
        %953 = vmatprep.subr.bf16.mxu0 0
        %954 = vmatpush1.bf16.xpose.msra.mxu0 0
        %955 = vmatprep.subr.bf16.mxu0 0
        %956 = vmatpush1.bf16.xpose.msra.mxu0 0
        %957 = vmatprep.subr.bf16.mxu0 0
        %958 = vmatpush1.bf16.xpose.msra.mxu0 0
        %959 = vmatprep.subr.bf16.mxu0 0
        %960 = vmatpush1.bf16.xpose.msra.mxu0 0
        %961 = vmatprep.subr.bf16.mxu0 0
        %962 = vmatpush1.bf16.xpose.msra.mxu0 0
        %963 = vmatprep.subr.bf16.mxu0 0
        %964 = vmatpush1.bf16.xpose.msra.mxu0 0
        %965 = vmatprep.subr.bf16.mxu0 0
        %966 = vmatpush1.bf16.xpose.msra.mxu0 0
        %967 = vmatprep.subr.bf16.mxu0 0
        %968 = vmatpush1.bf16.xpose.msra.mxu0 0
        %969 = vmatprep.subr.bf16.mxu0 0
        %970 = vmatpush1.bf16.xpose.msra.mxu0 0
        %971 = vmatprep.subr.bf16.mxu0 0
        %972 = vmatpush1.bf16.xpose.msra.mxu0 0
        %973 = vmatprep.mubr.bf16.mxu0 0
        %974 = vmatmul.mubr.bf16.gmra.mrb[0].mxu0 %v936
        %v975 = vpop.f32.mrb[0].mxu0
        %v976 = vadd.f32 0.0, %v975
        %v977 = vpop.f32.mrb[0].mxu0
        %v978 = vpop.f32.mrb[0].mxu0
        %v979 = vpop.f32.mrb[0].mxu0
        %980 = vdwg.mxu0
        %s981 = scalar_lea.vmem [#allocation3], 24
        %v982 = vld [vmem:[%s981] sm:$0xff]
        %v983 = vsel %vm518, %v976, -inf
        %984 = vmax.xlane.f32.xlu0 %v983
        %v985 = vpop.xlane.xlu0 %984
        %v986 = vmax.f32 %v982, %v985
        %v987 = vsub.f32 %v982, %v986
        %v988 = vmul.f32 %v987, 1.442695
        %v989 = vpow.pop %v988
        %991 = vset.pattern.permute.xlu0 0
        %992 = vperm.xlu0 %991, %v986
        %v993 = vpop.permute.xlu0 %992
        %v995 = vsub.f32 %v976, %v993
        %v996 = vmul.f32 %v995, 1.442695
        %v997 = vpow.pop %v996
        %s998 = scalar_lea.vmem [#allocation4], 24
        %v999 = vld [vmem:[%s998] sm:$0xff]
        %v1000 = vmul.f32 %v989, %v999
        %v1001 = vsel %vm518, %v997, 0.0
        %1002 = vadd.xlane.f32.xlu0 %v1001
        %v1003 = vpop.xlane.xlu0 %1002
        %v1004 = vadd.f32 %v1000, %v1003
        %1005 = vst.msk [vmem:[%s998] sm:$0xff] %vm587, %v1004
        %v1006 = vld [vmem:[#allocation5] sm:$0xff]
        %1008 = vset.pattern.permute.xlu0 0
        %1009 = vperm.xlu0 %1008, %v989
        %v1010 = vpop.permute.xlu0 %1009
        %v1012 = vmul.f32 %v1010, %v1006
        %v1013 = vpack.c.bf16 %v997, %v997
        %v1015 = vsel %vm518, %v1013, 0
        %v1017 = vsel %vm600, %v934, 0
        %1019 = vmatprep.subr.bf16.mxu0 0
        %1020 = vmatpush1.bf16.msra.mxu0 %v1017
        %1021 = vmatprep.subr.bf16.mxu0 0
        %1022 = vmatpush1.bf16.msra.mxu0 0
        %1023 = vmatprep.subr.bf16.mxu0 0
        %1024 = vmatpush1.bf16.msra.mxu0 0
        %1025 = vmatprep.subr.bf16.mxu0 0
        %1026 = vmatpush1.bf16.msra.mxu0 0
        %1027 = vmatprep.subr.bf16.mxu0 0
        %1028 = vmatpush1.bf16.msra.mxu0 0
        %1029 = vmatprep.subr.bf16.mxu0 0
        %1030 = vmatpush1.bf16.msra.mxu0 0
        %1031 = vmatprep.subr.bf16.mxu0 0
        %1032 = vmatpush1.bf16.msra.mxu0 0
        %1033 = vmatprep.subr.bf16.mxu0 0
        %1034 = vmatpush1.bf16.msra.mxu0 0
        %1035 = vmatprep.subr.bf16.mxu0 0
        %1036 = vmatpush1.bf16.msra.mxu0 0
        %1037 = vmatprep.subr.bf16.mxu0 0
        %1038 = vmatpush1.bf16.msra.mxu0 0
        %1039 = vmatprep.subr.bf16.mxu0 0
        %1040 = vmatpush1.bf16.msra.mxu0 0
        %1041 = vmatprep.subr.bf16.mxu0 0
        %1042 = vmatpush1.bf16.msra.mxu0 0
        %1043 = vmatprep.subr.bf16.mxu0 0
        %1044 = vmatpush1.bf16.msra.mxu0 0
        %1045 = vmatprep.subr.bf16.mxu0 0
        %1046 = vmatpush1.bf16.msra.mxu0 0
        %1047 = vmatprep.subr.bf16.mxu0 0
        %1048 = vmatpush1.bf16.msra.mxu0 0
        %1049 = vmatprep.subr.bf16.mxu0 0
        %1050 = vmatpush1.bf16.msra.mxu0 0
        %1051 = vmatprep.mubr.bf16.mxu0 0
        %1052 = vmatmul.mubr.bf16.gmra.mrb[0].mxu0 %v1015
        %v1053 = vpop.f32.mrb[0].mxu0
        %v1054 = vadd.f32 0.0, %v1053
        %v1055 = vpop.f32.mrb[0].mxu0
        %v1056 = vpop.f32.mrb[0].mxu0
        %v1057 = vpop.f32.mrb[0].mxu0
        %1058 = vdwg.mxu0
        %1060 = vrot.lane.b32.xlu0 %v1054, 24
        %v1061 = vpop.permute.xlu0 %1060
        %v1063 = vadd.f32 %v1012, %v1061
        %vm1064 = vcmask 261312
        %1065 = vst.msk [vmem:[#allocation5] sm:$0xff] %vm1064, %v1063
        %1066 = vst.msk [vmem:[%s981] sm:$0xff] %vm587, %v986
        // Predicated region
        $region65: #{tpu_custom_call.1} parent=43 // pred_check
          %p1067 = pneg %p361
        $region66: #{tpu_custom_call.1} parent=43 // pred_check_branch
          %1069 = sbr.rel (%p1067) target = $region68
        $region67: #{tpu_custom_call.1} parent=43 // pred_region
          %v1070 = vld [vmem:[#allocation4] sm:$0xff]
          %v1071 = vrcp.pop %v1070
          %v1072 = vld [vmem:[#allocation5] sm:$0xff]
          %1074 = vset.pattern.permute.xlu0 0
          %1075 = vperm.xlu0 %1074, %v1071
          %v1076 = vpop.permute.xlu0 %1075
          %v1078 = vmul.f32 %v1072, %v1076
          %1079 = vst.msk [vmem:[#allocation5] sm:$0xff] %vm518, %v1078
          %v1080 = vld [vmem:[%s718] sm:$0xff]
          %v1081 = vrcp.pop %v1080
          %v1082 = vld [vmem:[#allocation5] sm:$0xff]
          %1084 = vset.pattern.permute.xlu0 0
          %1085 = vperm.xlu0 %1084, %v1081
          %v1086 = vpop.permute.xlu0 %1085
          %v1088 = vmul.f32 %v1082, %v1086
          %1089 = vst.msk [vmem:[#allocation5] sm:$0xff] %vm784, %v1088
          %v1090 = vld [vmem:[%s858] sm:$0xff]
          %v1091 = vrcp.pop %v1090
          %v1092 = vld [vmem:[#allocation5] sm:$0xff]
          %1094 = vset.pattern.permute.xlu0 0
          %1095 = vperm.xlu0 %1094, %v1091
          %v1096 = vpop.permute.xlu0 %1095
          %v1098 = vmul.f32 %v1092, %v1096
          %1099 = vst.msk [vmem:[#allocation5] sm:$0xff] %vm924, %v1098
          %v1100 = vld [vmem:[%s998] sm:$0xff]
          %v1101 = vrcp.pop %v1100
          %v1102 = vld [vmem:[#allocation5] sm:$0xff]
          %1104 = vset.pattern.permute.xlu0 0
          %1105 = vperm.xlu0 %1104, %v1101
          %v1106 = vpop.permute.xlu0 %1105
          %v1108 = vmul.f32 %v1102, %v1106
          %1109 = vst.msk [vmem:[#allocation5] sm:$0xff] %vm1064, %v1108
          %v1110 = vld [vmem:[#allocation5] sm:$0xff]
          %1111 = vst.msk [vmem:[%s359] sm:$0xff] %vm472, %v1110
        $region68: #{tpu_custom_call.1} parent=43 // pred_fallthru
          _
        %s1112 = sand.u32 %s196, 1
        %s1113 = scalar_lea.sflag [#allocation8], %s1112
        %s1114 = sand.u32 %s196, 1
        %s1115 = smul.addr %s1114, 8
        %s1116 = scalar_lea.vmem [#allocation14], %s1115
        // Predicated region
        $region69: #{tpu_custom_call.1} parent=43 // pred_check
          %p1117 = pneg %p206
        $region70: #{tpu_custom_call.1} parent=43 // pred_check_branch
          %1119 = sbr.rel (%p1117) target = $region72
        $region71: #{tpu_custom_call.1} parent=43 // pred_region
          %s1121 = ssub.s32 128, 128
          %1122 = vsyncadd %s1113, %s1121
          %s1123 = sadd.s32 %s33, %s32
          %s1124 = smul.addr %s1123, 128
          %s1125 = scalar_lea.hbm %s6, %s1124
          %s1127 = sshll.u32 %s1116, 4
          %s1128 = int_to_ptr.vmem [resolvable:$true] %s1127
          %1130 = dma.vmem_to_hbm [thread:$0]  %s1128, 128, %s1125, %s1113
        $region72: #{tpu_custom_call.1} parent=43 // pred_fallthru
          _
      $region44: #{tpu_custom_call.1} parent=5 // pred_fallthru
        _
      %p1131 = scmp.le.s32.totalorder 2, %s22
      // Predicated region
      $region73: #{tpu_custom_call.1} parent=5 // pred_check
        %p1132 = pneg %p1131
      $region74: #{tpu_custom_call.1} parent=5 // pred_check_branch
        %1134 = sbr.rel (%p1132) target = $region76
      $region75: #{tpu_custom_call.1} parent=5 // pred_region
        %s1135 = ssub.s32 %s22, 2
        // Predicated region
        $region77: #{tpu_custom_call.1} parent=75 // pred_check
          %p1136 = pneg %p212
        $region78: #{tpu_custom_call.1} parent=75 // pred_check_branch
          %1138 = sbr.rel (%p1136) target = $region80
        $region79: #{tpu_custom_call.1} parent=75 // pred_region
          %s1139 = sand.u32 %s197, 1
          %s1140 = scalar_lea.sflag [#allocation8], %s1139
          %s1141 = sand.u32 %s197, 1
          %s1142 = smul.addr %s1141, 8
          %s1143 = scalar_lea.vmem [#allocation14], %s1142
          %1144 = dma.done %s1140, 128
        $region80: #{tpu_custom_call.1} parent=75 // pred_fallthru
          _
      $region76: #{tpu_custom_call.1} parent=5 // pred_fallthru
        _
    $region6: #{tpu_custom_call.1} parent=1 // loop_footer
      %s26 = sadd.s32 1, %s22
    $region7: #{tpu_custom_call.1} parent=1 // loop_footer_branch
      %21 = sbr.rel target = $region3
    $region8: #{tpu_custom_call.1} parent=1 // loop_exit
      _
    %1145 = vsyncpa [#allocation7], 1
    %s1146 = scalar_lea.sflag [#allocation7], 1
    %1147 = vsyncpa %s1146, 1
    %1148 = vsyncpa [#allocation10], 1
    %s1149 = scalar_lea.sflag [#allocation10], 1
    %1150 = vsyncpa %s1149, 1
    %1151 = vsyncpa [#allocation13], 1
    %1152 = vsyncpa [#allocation8], 1
    %s1153 = scalar_lea.sflag [#allocation8], 1
    %1154 = vsyncpa %s1153, 1

</llo_original>
